<compile_context>
chip_gen: v7x
topology: tpu7x:2x2x1
jax: 0.10.0
libtpu: 0.0.40
codegen_flags: <defaults>
</compile_context>

<pallas_src>
import functools

import numpy as np
import jax
import jax.numpy as jnp
from jax.experimental import pallas as pl
from jax.experimental.pallas import tpu as pltpu

CP = 128    # lane-padded channel width of every activation / weight slab
TAP = 32    # per-tap lane stride in the packed weight / im2col slab (cin <= TAP)


# ----------------------------------------------------------------------------
# Fused Pallas kernel
# ----------------------------------------------------------------------------

def _fused_ldm_kernel(t_ref, sa_tab_ref, sb_tab_ref,          # SMEM
                      x_ref, n_ref, temb_tab_ref,             # VMEM data
                      w_in_ref, b_in_ref,
                      w_dn_ref, b_dn_ref,
                      w_md_ref, b_md_ref,
                      w_upa_ref, w_upb_ref, b_up_ref,
                      w_out_ref, b_out_ref,
                      loss_ref, *, B, L, K, T):
    BL = B * L
    Ld = L // 2
    BLd = B * Ld

    def im2col(h, seg):
        """h: (M, CP) f32 with data only in lanes [0, TAP).

        Returns the (M, CP) bf16 slab [h[l-1] @lanes 0:TAP | h[l] @TAP:2TAP |
        h[l+1] @2TAP:3TAP], zero halo at per-batch segment edges (== conv1d
        pad=1, no cross-batch leakage).  Matches the packed weight layout.
        """
        M = h.shape[0]
        up = pltpu.roll(h, shift=1, axis=0)          # up[l] = h[l-1] (wraps)
        dn = pltpu.roll(h, shift=M - 1, axis=0)      # dn[l] = h[l+1] (wraps)
        ridx = jax.lax.broadcasted_iota(jnp.int32, (M, 1), 0)
        if seg & (seg - 1) == 0:                     # power-of-two fast path
            pos = jnp.bitwise_and(ridx, seg - 1)
        else:
            pos = ridx % seg
        up = jnp.where(pos == 0, 0.0, up)
        dn = jnp.where(pos == seg - 1, 0.0, dn)
        # Lanes outside [0, TAP) are zero, so lane-rolls + adds == tap packing.
        slab = up + pltpu.roll(h, shift=TAP, axis=1) + pltpu.roll(dn, shift=2 * TAP, axis=1)
        return slab.astype(jnp.bfloat16)

    def conv(slab, w_ref, b_ref, silu, slab2=None, w2_ref=None):
        """conv1d(k=3, pad=1) as ONE MXU dot on the packed slab (f32 accum)."""
        acc = jnp.dot(slab, w_ref[...], preferred_element_type=jnp.float32)
        if slab2 is not None:                        # split-weight skip branch,
            acc = acc + jnp.dot(slab2, w2_ref[...],  # chained into same f32 acc
                                preferred_element_type=jnp.float32)
        acc = acc + b_ref[...]                       # (1, CP) broadcast, f32
        if silu:
            acc = acc * jax.nn.sigmoid(acc)          # f32 (v5e: no bf16 VPU/EUP)
        return acc

    x = x_ref[...]        # (BL, CP) f32, data in lanes [0, K), zeros elsewhere
    noise = n_ref[...]    # (BL, CP) f32

    # --- noisy = sqrt(a)*x + sqrt(1-a)*noise  (+ time-embedding lanes) -------
    # Vectorized per-row select; schedule scalars gathered from SMEM tables and
    # the sinusoidal embedding gathered from a precomputed VMEM table (its
    # lanes [K, K+2T) are disjoint from x/noise lanes, so "+" == channel concat).
    ridx = jax.lax.broadcasted_iota(jnp.int32, (BL, 1), 0)
    sa_rows = jnp.zeros((BL, 1), jnp.float32)
    sb_rows = jnp.zeros((BL, 1), jnp.float32)
    temb_rows = jnp.zeros((BL, CP), jnp.float32)
    for b in range(B):                               # static tiny loop, pure VPU
        tb = t_ref[b]
        sel = jnp.logical_and(ridx >= b * L, ridx < (b + 1) * L)
        sa_rows = jnp.where(sel, sa_tab_ref[tb], sa_rows)
        sb_rows = jnp.where(sel, sb_tab_ref[tb], sb_rows)
        temb_b = temb_tab_ref[pl.ds(tb, 1), :]       # (1, CP) dynamic row load
        temb_rows = jnp.where(sel, temb_b, temb_rows)

    h = sa_rows * x + sb_rows * noise + temb_rows    # (BL, CP) f32

    # --- U-Net ----------------------------------------------------------------
    h0 = conv(im2col(h, seg=L), w_in_ref, b_in_ref, silu=True)

    slab_h0 = im2col(h0, seg=L)                      # built ONCE, reused below
    dfull = conv(slab_h0, w_dn_ref, b_dn_ref, silu=True)

    # stride-2 downsample: exact 0/1 selection built in-kernel, one bf16 pass.
    rd = jax.lax.broadcasted_iota(jnp.int32, (BLd, BL), 0)
    cd = jax.lax.broadcasted_iota(jnp.int32, (BLd, BL), 1)
    dmat = jnp.where(cd == 2 * rd, 1.0, 0.0).astype(jnp.bfloat16)
    hd = jnp.dot(dmat, dfull.astype(jnp.bfloat16), preferred_element_type=jnp.float32)

    hm = conv(im2col(hd, seg=Ld), w_md_ref, b_md_ref, silu=True)

    # nearest-neighbour x2 upsample: exact 0/1 selection, one bf16 pass.
    ru = jax.lax.broadcasted_iota(jnp.int32, (BL, BLd), 0)
    cu = jax.lax.broadcasted_iota(jnp.int32, (BL, BLd), 1)
    umat = jnp.where(jnp.logical_or(ru == 2 * cu, ru == 2 * cu + 1), 1.0, 0.0)
    hu = jnp.dot(umat.astype(jnp.bfloat16), hm.astype(jnp.bfloat16),
                 preferred_element_type=jnp.float32)

    hup = conv(im2col(hu, seg=L), w_upa_ref, b_up_ref, silu=True,
               slab2=slab_h0, w2_ref=w_upb_ref)      # skip concat via weight split
    pred = conv(im2col(hup, seg=L), w_out_ref, b_out_ref, silu=False)

    # --- MSE (padded lanes of pred and noise are identically zero) -----------
    d = pred - noise
    loss_ref[0, 0] = jnp.sum(d * d) * (1.0 / float(BL * K))


# ----------------------------------------------------------------------------
# One-time parameter / schedule packing (host side, outside the kernel)
# ----------------------------------------------------------------------------

def _pack_w(w):
    """(3, cin, cout) -> (CP, CP) bf16; tap k occupies rows [k*TAP, k*TAP+cin)."""
    w = np.asarray(w, np.float32)
    kk, cin, cout = w.shape
    assert kk == 3 and cin <= TAP and cout <= CP, (kk, cin, cout)
    wp = np.zeros((CP, CP), np.float32)
    for tap in range(kk):
        wp[tap * TAP:tap * TAP + cin, :cout] = w[tap]
    return jnp.asarray(wp, jnp.bfloat16)


def _pack_b(b_vec):
    b_vec = np.asarray(b_vec, np.float32)
    out = np.zeros((1, CP), np.float32)
    out[0, :b_vec.shape[0]] = b_vec
    return jnp.asarray(out)


def init_params(key, cfg):
    K = cfg['latent_channels']
    T = cfg['time_embedding_dim']
    C0 = cfg['base_channels']
    Cin = K + 2 * T
    ks = jax.random.split(key, 5)

    def conv_w(k, cin, cout):
        scale = 1.0 / np.sqrt(3.0 * cin)
        return jax.random.normal(k, (3, cin, cout), jnp.float32) * scale

    w_in = conv_w(ks[0], Cin, C0)
    w_dn = conv_w(ks[1], C0, C0)
    w_md = conv_w(ks[2], C0, C0)
    w_up = conv_w(ks[3], 2 * C0, C0)
    w_out = conv_w(ks[4], C0, K)
    zeros = lambda c: np.zeros((c,), np.float32)
    return {
        'w_in': _pack_w(w_in), 'b_in': _pack_b(zeros(C0)),
        'w_dn': _pack_w(w_dn), 'b_dn': _pack_b(zeros(C0)),
        'w_md': _pack_w(w_md), 'b_md': _pack_b(zeros(C0)),
        'w_upa': _pack_w(np.asarray(w_up)[:, :C0, :]),   # upsampled-mid half
        'w_upb': _pack_w(np.asarray(w_up)[:, C0:, :]),   # skip half
        'b_up': _pack_b(zeros(C0)),
        'w_out': _pack_w(w_out), 'b_out': _pack_b(zeros(K)),
    }


def make_schedule(cfg):
    """Diffusion schedule + sinusoidal-embedding tables, computed ONCE."""
    S = cfg['num_steps']
    T = cfg['time_embedding_dim']
    K = cfg['latent_channels']
    beta = np.linspace(cfg['beta_start'], cfg['beta_end'], S)
    alpha_hat = 1.0 - beta
    alpha = np.cumprod(alpha_hat)                    # == alpha_torch squeezed

    t_all = np.arange(S, dtype=np.float32)
    freqs = np.exp(-np.log(10000.0) * np.arange(T, dtype=np.float32) / T)
    args = t_all[:, None] * freqs[None, :]
    emb = np.concatenate([np.sin(args), np.cos(args)], axis=-1)   # (S, 2T)
    temb_tab = np.zeros((S, CP), np.float32)
    temb_tab[:, K:K + 2 * T] = emb                   # lanes [K, K+2T)

    return {
        'sa_tab': jnp.asarray(np.sqrt(alpha), jnp.float32),        # (S,) SMEM
        'sb_tab': jnp.asarray(np.sqrt(1.0 - alpha), jnp.float32),  # (S,) SMEM
        'temb_tab': jnp.asarray(temb_tab),                         # (S, CP) VMEM
    }


# ----------------------------------------------------------------------------
# Loss wrapper (mirrors LDMUNet.forward -> calc_loss)
# ----------------------------------------------------------------------------

def ldm_unet_loss(observed_ncl, t, noise_ncl, params, sched, cfg):
    B, K, L = observed_ncl.shape
    T = cfg['time_embedding_dim']
    BL = B * L

    # NCL -> NLC, fold batch into M, pad channels to 128 lanes.  These few tiny
    # ops fuse into XLA input copies; everything else runs inside the kernel.
    x = jnp.transpose(observed_ncl, (0, 2, 1)).astype(jnp.float32).reshape(BL, K)
    n = jnp.transpose(noise_ncl, (0, 2, 1)).astype(jnp.float32).reshape(BL, K)
    x_p = jnp.pad(x, ((0, 0), (0, CP - K)))
    n_p = jnp.pad(n, ((0, 0), (0, CP - K)))

    smem = lambda: pl.BlockSpec(memory_space=pltpu.MemorySpace.SMEM)
    vmem = lambda: pl.BlockSpec(memory_space=pltpu.MemorySpace.VMEM)

    kernel = functools.partial(_fused_ldm_kernel, B=B, L=L, K=K, T=T)
    loss = pl.pallas_call(
        kernel,
        out_shape=jax.ShapeDtypeStruct((1, 1), jnp.float32),
        in_specs=[smem(), smem(), smem()] + [vmem() for _ in range(14)],
        out_specs=smem(),                            # scalar loss in SMEM
    )(t.astype(jnp.int32), sched['sa_tab'], sched['sb_tab'],
      x_p, n_p, sched['temb_tab'],
      params['w_in'], params['b_in'],
      params['w_dn'], params['b_dn'],
      params['w_md'], params['b_md'],
      params['w_upa'], params['w_upb'], params['b_up'],
      params['w_out'], params['b_out'])
    return loss[0, 0]


# ----------------------------------------------------------------------------
# Main
# ----------------------------------------------------------------------------

if __name__ == "__main__":
    cfg = dict(
        latent_dim=16,          # L
        latent_channels=4,      # K
        time_embedding_dim=8,   # T
        base_channels=32,
        num_steps=50,
        beta_start=1e-4,
        beta_end=0.02,
    )
    B, K, L = 2, cfg['latent_channels'], cfg['latent_dim']

    sched = make_schedule(cfg)

    key = jax.random.PRNGKey(0)
    k_param, k_x, k_t, k_noise = jax.random.split(key, 4)
    params = init_params(k_param, cfg)

    observed = jax.random.normal(k_x, (B, K, L), jnp.float32)   # batch (B, K, L)
    t = jax.random.randint(k_t, (B,), 0, cfg['num_steps'])      # torch.randint
    noise = jax.random.normal(k_noise, (B, K, L), jnp.float32)  # torch.randn_like

    loss_fn = jax.jit(functools.partial(ldm_unet_loss, cfg=cfg))
    loss = loss_fn(observed, t, noise, params, sched)
    jax.block_until_ready(loss)
    assert loss.shape == () and bool(jnp.isfinite(loss))
    print("KERNEL_OK")
</pallas_src>

<mosaic_0001>
module attributes {stable_mosaic.version = 11 : i64} {
  func.func @_fused_ldm_kernel(%arg0: memref<2xi32, #tpu.memory_space<smem>>, %arg1: memref<50xf32, #tpu.memory_space<smem>>, %arg2: memref<50xf32, #tpu.memory_space<smem>>, %arg3: memref<32x128xf32, #tpu.memory_space<vmem>>, %arg4: memref<32x128xf32, #tpu.memory_space<vmem>>, %arg5: memref<50x128xf32, #tpu.memory_space<vmem>>, %arg6: memref<128x128xbf16, #tpu.memory_space<vmem>>, %arg7: memref<1x128xf32, #tpu.memory_space<vmem>>, %arg8: memref<128x128xbf16, #tpu.memory_space<vmem>>, %arg9: memref<1x128xf32, #tpu.memory_space<vmem>>, %arg10: memref<128x128xbf16, #tpu.memory_space<vmem>>, %arg11: memref<1x128xf32, #tpu.memory_space<vmem>>, %arg12: memref<128x128xbf16, #tpu.memory_space<vmem>>, %arg13: memref<128x128xbf16, #tpu.memory_space<vmem>>, %arg14: memref<1x128xf32, #tpu.memory_space<vmem>>, %arg15: memref<128x128xbf16, #tpu.memory_space<vmem>>, %arg16: memref<1x128xf32, #tpu.memory_space<vmem>>, %arg17: memref<1x1xf32, #tpu.memory_space<smem>>) attributes {dimension_semantics = [], scalar_prefetch = 0 : i64, scratch_operands = 0 : i64, tpu.core_type = #tpu.core_type<tc>} {
    %c0 = arith.constant 0 : index
    %c0_0 = arith.constant 0 : index
    %0 = vector.load %arg3[%c0, %c0_0] : memref<32x128xf32, #tpu.memory_space<vmem>>, vector<32x128xf32>
    %c0_1 = arith.constant 0 : index
    %c0_2 = arith.constant 0 : index
    %1 = vector.load %arg4[%c0_1, %c0_2] : memref<32x128xf32, #tpu.memory_space<vmem>>, vector<32x128xf32>
    %2 = tpu.iota {dimensions = array<i32: 0>} : vector<32x1xi32>
    %cst = arith.constant 0.000000e+00 : f32
    %3 = vector.broadcast %cst : f32 to vector<32x1xf32>
    %cst_3 = arith.constant 0.000000e+00 : f32
    %4 = vector.broadcast %cst_3 : f32 to vector<32x1xf32>
    %cst_4 = arith.constant 0.000000e+00 : f32
    %5 = vector.broadcast %cst_4 : f32 to vector<32x128xf32>
    %c0_5 = arith.constant 0 : index
    %6 = memref.load %arg0[%c0_5] : memref<2xi32, #tpu.memory_space<smem>>
    %c0_i32 = arith.constant 0 : i32
    %7 = vector.broadcast %c0_i32 : i32 to vector<32x1xi32>
    %8 = arith.cmpi sge, %2, %7 : vector<32x1xi32>
    %c16_i32 = arith.constant 16 : i32
    %9 = vector.broadcast %c16_i32 : i32 to vector<32x1xi32>
    %10 = arith.cmpi slt, %2, %9 : vector<32x1xi32>
    %11 = arith.andi %8, %10 : vector<32x1xi1>
    %12 = arith.index_cast %6 : i32 to index
    %13 = memref.load %arg1[%12] : memref<50xf32, #tpu.memory_space<smem>>
    %14 = vector.broadcast %13 : f32 to vector<32x1xf32>
    %15 = arith.select %11, %14, %3 : vector<32x1xi1>, vector<32x1xf32>
    %16 = arith.index_cast %6 : i32 to index
    %17 = memref.load %arg2[%16] : memref<50xf32, #tpu.memory_space<smem>>
    %18 = vector.broadcast %17 : f32 to vector<32x1xf32>
    %19 = arith.select %11, %18, %4 : vector<32x1xi1>, vector<32x1xf32>
    %20 = arith.index_cast %6 : i32 to index
    %c0_6 = arith.constant 0 : index
    %21 = vector.load %arg5[%20, %c0_6] : memref<50x128xf32, #tpu.memory_space<vmem>>, vector<1x128xf32>
    %22 = vector.shape_cast %11 : vector<32x1xi1> to vector<32x1xi1>
    %23 = vector.broadcast %22 : vector<32x1xi1> to vector<32x128xi1>
    %24 = vector.shape_cast %21 : vector<1x128xf32> to vector<1x128xf32>
    %25 = vector.broadcast %24 : vector<1x128xf32> to vector<32x128xf32>
    %26 = arith.select %23, %25, %5 : vector<32x128xi1>, vector<32x128xf32>
    %c1 = arith.constant 1 : index
    %27 = memref.load %arg0[%c1] : memref<2xi32, #tpu.memory_space<smem>>
    %c16_i32_7 = arith.constant 16 : i32
    %28 = vector.broadcast %c16_i32_7 : i32 to vector<32x1xi32>
    %29 = arith.cmpi sge, %2, %28 : vector<32x1xi32>
    %c32_i32 = arith.constant 32 : i32
    %30 = vector.broadcast %c32_i32 : i32 to vector<32x1xi32>
    %31 = arith.cmpi slt, %2, %30 : vector<32x1xi32>
    %32 = arith.andi %29, %31 : vector<32x1xi1>
    %33 = arith.index_cast %27 : i32 to index
    %34 = memref.load %arg1[%33] : memref<50xf32, #tpu.memory_space<smem>>
    %35 = vector.broadcast %34 : f32 to vector<32x1xf32>
    %36 = arith.select %32, %35, %15 : vector<32x1xi1>, vector<32x1xf32>
    %37 = arith.index_cast %27 : i32 to index
    %38 = memref.load %arg2[%37] : memref<50xf32, #tpu.memory_space<smem>>
    %39 = vector.broadcast %38 : f32 to vector<32x1xf32>
    %40 = arith.select %32, %39, %19 : vector<32x1xi1>, vector<32x1xf32>
    %41 = arith.index_cast %27 : i32 to index
    %c0_8 = arith.constant 0 : index
    %42 = vector.load %arg5[%41, %c0_8] : memref<50x128xf32, #tpu.memory_space<vmem>>, vector<1x128xf32>
    %43 = vector.shape_cast %32 : vector<32x1xi1> to vector<32x1xi1>
    %44 = vector.broadcast %43 : vector<32x1xi1> to vector<32x128xi1>
    %45 = vector.shape_cast %42 : vector<1x128xf32> to vector<1x128xf32>
    %46 = vector.broadcast %45 : vector<1x128xf32> to vector<32x128xf32>
    %47 = arith.select %44, %46, %26 : vector<32x128xi1>, vector<32x128xf32>
    %48 = vector.broadcast %36 : vector<32x1xf32> to vector<32x128xf32>
    %49 = arith.mulf %48, %0 : vector<32x128xf32>
    %50 = vector.broadcast %40 : vector<32x1xf32> to vector<32x128xf32>
    %51 = arith.mulf %50, %1 : vector<32x128xf32>
    %52 = arith.addf %49, %51 : vector<32x128xf32>
    %53 = arith.addf %52, %47 : vector<32x128xf32>
    %c1_i32 = arith.constant 1 : i32
    %54 = tpu.dynamic_rotate %53 by %c1_i32 dim 0 : vector<32x128xf32>, i32 -> vector<32x128xf32>
    %c31_i32 = arith.constant 31 : i32
    %55 = tpu.dynamic_rotate %53 by %c31_i32 dim 0 : vector<32x128xf32>, i32 -> vector<32x128xf32>
    %56 = tpu.iota {dimensions = array<i32: 0>} : vector<32x1xi32>
    %c15_i32 = arith.constant 15 : i32
    %57 = vector.broadcast %c15_i32 : i32 to vector<32x1xi32>
    %58 = arith.andi %56, %57 : vector<32x1xi32>
    %c0_i32_9 = arith.constant 0 : i32
    %59 = vector.broadcast %c0_i32_9 : i32 to vector<32x1xi32>
    %60 = arith.cmpi eq, %58, %59 : vector<32x1xi32>
    %cst_10 = arith.constant 0.000000e+00 : f32
    %61 = vector.shape_cast %60 : vector<32x1xi1> to vector<32x1xi1>
    %62 = vector.broadcast %61 : vector<32x1xi1> to vector<32x128xi1>
    %63 = vector.broadcast %cst_10 : f32 to vector<32x128xf32>
    %64 = arith.select %62, %63, %54 : vector<32x128xi1>, vector<32x128xf32>
    %c15_i32_11 = arith.constant 15 : i32
    %65 = vector.broadcast %c15_i32_11 : i32 to vector<32x1xi32>
    %66 = arith.cmpi eq, %58, %65 : vector<32x1xi32>
    %cst_12 = arith.constant 0.000000e+00 : f32
    %67 = vector.shape_cast %66 : vector<32x1xi1> to vector<32x1xi1>
    %68 = vector.broadcast %67 : vector<32x1xi1> to vector<32x128xi1>
    %69 = vector.broadcast %cst_12 : f32 to vector<32x128xf32>
    %70 = arith.select %68, %69, %55 : vector<32x128xi1>, vector<32x128xf32>
    %c32_i32_13 = arith.constant 32 : i32
    %71 = tpu.dynamic_rotate %53 by %c32_i32_13 dim 1 : vector<32x128xf32>, i32 -> vector<32x128xf32>
    %72 = arith.addf %64, %71 : vector<32x128xf32>
    %c64_i32 = arith.constant 64 : i32
    %73 = tpu.dynamic_rotate %70 by %c64_i32 dim 1 : vector<32x128xf32>, i32 -> vector<32x128xf32>
    %74 = arith.addf %72, %73 : vector<32x128xf32>
    %75 = arith.truncf %74 : vector<32x128xf32> to vector<32x128xbf16>
    %c0_14 = arith.constant 0 : index
    %c0_15 = arith.constant 0 : index
    %76 = vector.load %arg6[%c0_14, %c0_15] : memref<128x128xbf16, #tpu.memory_space<vmem>>, vector<128x128xbf16>
    %cst_16 = arith.constant dense<0.000000e+00> : vector<32x128xf32>
    %77 = tpu.matmul %75, %76, %cst_16 {dimension_numbers = #tpu.dot_dimension_numbers<[1], [0], [0], [1], [0, 0, 1, 1], [], []>} : vector<32x128xbf16>, vector<128x128xbf16>, vector<32x128xf32> -> vector<32x128xf32>
    %c0_17 = arith.constant 0 : index
    %c0_18 = arith.constant 0 : index
    %78 = vector.load %arg7[%c0_17, %c0_18] : memref<1x128xf32, #tpu.memory_space<vmem>>, vector<1x128xf32>
    %79 = vector.broadcast %78 : vector<1x128xf32> to vector<32x128xf32>
    %80 = arith.addf %77, %79 : vector<32x128xf32>
    %81 = arith.negf %80 : vector<32x128xf32>
    %82 = math.exp %81 : vector<32x128xf32>
    %cst_19 = arith.constant 1.000000e+00 : f32
    %83 = vector.broadcast %cst_19 : f32 to vector<32x128xf32>
    %84 = arith.addf %83, %82 : vector<32x128xf32>
    %85 = arith.divf %83, %84 : vector<32x128xf32>
    %86 = arith.mulf %80, %85 : vector<32x128xf32>
    %c1_i32_20 = arith.constant 1 : i32
    %87 = tpu.dynamic_rotate %86 by %c1_i32_20 dim 0 : vector<32x128xf32>, i32 -> vector<32x128xf32>
    %c31_i32_21 = arith.constant 31 : i32
    %88 = tpu.dynamic_rotate %86 by %c31_i32_21 dim 0 : vector<32x128xf32>, i32 -> vector<32x128xf32>
    %89 = tpu.iota {dimensions = array<i32: 0>} : vector<32x1xi32>
    %c15_i32_22 = arith.constant 15 : i32
    %90 = vector.broadcast %c15_i32_22 : i32 to vector<32x1xi32>
    %91 = arith.andi %89, %90 : vector<32x1xi32>
    %c0_i32_23 = arith.constant 0 : i32
    %92 = vector.broadcast %c0_i32_23 : i32 to vector<32x1xi32>
    %93 = arith.cmpi eq, %91, %92 : vector<32x1xi32>
    %cst_24 = arith.constant 0.000000e+00 : f32
    %94 = vector.shape_cast %93 : vector<32x1xi1> to vector<32x1xi1>
    %95 = vector.broadcast %94 : vector<32x1xi1> to vector<32x128xi1>
    %96 = vector.broadcast %cst_24 : f32 to vector<32x128xf32>
    %97 = arith.select %95, %96, %87 : vector<32x128xi1>, vector<32x128xf32>
    %c15_i32_25 = arith.constant 15 : i32
    %98 = vector.broadcast %c15_i32_25 : i32 to vector<32x1xi32>
    %99 = arith.cmpi eq, %91, %98 : vector<32x1xi32>
    %cst_26 = arith.constant 0.000000e+00 : f32
    %100 = vector.shape_cast %99 : vector<32x1xi1> to vector<32x1xi1>
    %101 = vector.broadcast %100 : vector<32x1xi1> to vector<32x128xi1>
    %102 = vector.broadcast %cst_26 : f32 to vector<32x128xf32>
    %103 = arith.select %101, %102, %88 : vector<32x128xi1>, vector<32x128xf32>
    %c32_i32_27 = arith.constant 32 : i32
    %104 = tpu.dynamic_rotate %86 by %c32_i32_27 dim 1 : vector<32x128xf32>, i32 -> vector<32x128xf32>
    %105 = arith.addf %97, %104 : vector<32x128xf32>
    %c64_i32_28 = arith.constant 64 : i32
    %106 = tpu.dynamic_rotate %103 by %c64_i32_28 dim 1 : vector<32x128xf32>, i32 -> vector<32x128xf32>
    %107 = arith.addf %105, %106 : vector<32x128xf32>
    %108 = arith.truncf %107 : vector<32x128xf32> to vector<32x128xbf16>
    %c0_29 = arith.constant 0 : index
    %c0_30 = arith.constant 0 : index
    %109 = vector.load %arg8[%c0_29, %c0_30] : memref<128x128xbf16, #tpu.memory_space<vmem>>, vector<128x128xbf16>
    %cst_31 = arith.constant dense<0.000000e+00> : vector<32x128xf32>
    %110 = tpu.matmul %108, %109, %cst_31 {dimension_numbers = #tpu.dot_dimension_numbers<[1], [0], [0], [1], [0, 0, 1, 1], [], []>} : vector<32x128xbf16>, vector<128x128xbf16>, vector<32x128xf32> -> vector<32x128xf32>
    %c0_32 = arith.constant 0 : index
    %c0_33 = arith.constant 0 : index
    %111 = vector.load %arg9[%c0_32, %c0_33] : memref<1x128xf32, #tpu.memory_space<vmem>>, vector<1x128xf32>
    %112 = vector.broadcast %111 : vector<1x128xf32> to vector<32x128xf32>
    %113 = arith.addf %110, %112 : vector<32x128xf32>
    %114 = arith.negf %113 : vector<32x128xf32>
    %115 = math.exp %114 : vector<32x128xf32>
    %cst_34 = arith.constant 1.000000e+00 : f32
    %116 = vector.broadcast %cst_34 : f32 to vector<32x128xf32>
    %117 = arith.addf %116, %115 : vector<32x128xf32>
    %118 = arith.divf %116, %117 : vector<32x128xf32>
    %119 = arith.mulf %113, %118 : vector<32x128xf32>
    %120 = tpu.iota {dimensions = array<i32: 0>} : vector<16x32xi32>
    %121 = tpu.iota {dimensions = array<i32: 1>} : vector<16x32xi32>
    %c2_i32 = arith.constant 2 : i32
    %122 = vector.broadcast %c2_i32 : i32 to vector<16x32xi32>
    %123 = arith.muli %122, %120 : vector<16x32xi32>
    %124 = arith.cmpi eq, %121, %123 : vector<16x32xi32>
    %cst_35 = arith.constant 1.000000e+00 : f32
    %cst_36 = arith.constant 0.000000e+00 : f32
    %125 = vector.broadcast %cst_35 : f32 to vector<16x32xf32>
    %126 = vector.broadcast %cst_36 : f32 to vector<16x32xf32>
    %127 = arith.select %124, %125, %126 : vector<16x32xi1>, vector<16x32xf32>
    %128 = arith.truncf %127 : vector<16x32xf32> to vector<16x32xbf16>
    %129 = arith.truncf %119 : vector<32x128xf32> to vector<32x128xbf16>
    %cst_37 = arith.constant dense<0.000000e+00> : vector<16x128xf32>
    %130 = tpu.matmul %128, %129, %cst_37 {dimension_numbers = #tpu.dot_dimension_numbers<[1], [0], [0], [1], [0, 0, 1, 1], [], []>} : vector<16x32xbf16>, vector<32x128xbf16>, vector<16x128xf32> -> vector<16x128xf32>
    %c1_i32_38 = arith.constant 1 : i32
    %131 = tpu.dynamic_rotate %130 by %c1_i32_38 dim 0 : vector<16x128xf32>, i32 -> vector<16x128xf32>
    %c15_i32_39 = arith.constant 15 : i32
    %132 = tpu.dynamic_rotate %130 by %c15_i32_39 dim 0 : vector<16x128xf32>, i32 -> vector<16x128xf32>
    %133 = tpu.iota {dimensions = array<i32: 0>} : vector<16x1xi32>
    %c7_i32 = arith.constant 7 : i32
    %134 = vector.broadcast %c7_i32 : i32 to vector<16x1xi32>
    %135 = arith.andi %133, %134 : vector<16x1xi32>
    %c0_i32_40 = arith.constant 0 : i32
    %136 = vector.broadcast %c0_i32_40 : i32 to vector<16x1xi32>
    %137 = arith.cmpi eq, %135, %136 : vector<16x1xi32>
    %cst_41 = arith.constant 0.000000e+00 : f32
    %138 = vector.shape_cast %137 : vector<16x1xi1> to vector<16x1xi1>
    %139 = vector.broadcast %138 : vector<16x1xi1> to vector<16x128xi1>
    %140 = vector.broadcast %cst_41 : f32 to vector<16x128xf32>
    %141 = arith.select %139, %140, %131 : vector<16x128xi1>, vector<16x128xf32>
    %c7_i32_42 = arith.constant 7 : i32
    %142 = vector.broadcast %c7_i32_42 : i32 to vector<16x1xi32>
    %143 = arith.cmpi eq, %135, %142 : vector<16x1xi32>
    %cst_43 = arith.constant 0.000000e+00 : f32
    %144 = vector.shape_cast %143 : vector<16x1xi1> to vector<16x1xi1>
    %145 = vector.broadcast %144 : vector<16x1xi1> to vector<16x128xi1>
    %146 = vector.broadcast %cst_43 : f32 to vector<16x128xf32>
    %147 = arith.select %145, %146, %132 : vector<16x128xi1>, vector<16x128xf32>
    %c32_i32_44 = arith.constant 32 : i32
    %148 = tpu.dynamic_rotate %130 by %c32_i32_44 dim 1 : vector<16x128xf32>, i32 -> vector<16x128xf32>
    %149 = arith.addf %141, %148 : vector<16x128xf32>
    %c64_i32_45 = arith.constant 64 : i32
    %150 = tpu.dynamic_rotate %147 by %c64_i32_45 dim 1 : vector<16x128xf32>, i32 -> vector<16x128xf32>
    %151 = arith.addf %149, %150 : vector<16x128xf32>
    %152 = arith.truncf %151 : vector<16x128xf32> to vector<16x128xbf16>
    %c0_46 = arith.constant 0 : index
    %c0_47 = arith.constant 0 : index
    %153 = vector.load %arg10[%c0_46, %c0_47] : memref<128x128xbf16, #tpu.memory_space<vmem>>, vector<128x128xbf16>
    %cst_48 = arith.constant dense<0.000000e+00> : vector<16x128xf32>
    %154 = tpu.matmul %152, %153, %cst_48 {dimension_numbers = #tpu.dot_dimension_numbers<[1], [0], [0], [1], [0, 0, 1, 1], [], []>} : vector<16x128xbf16>, vector<128x128xbf16>, vector<16x128xf32> -> vector<16x128xf32>
    %c0_49 = arith.constant 0 : index
    %c0_50 = arith.constant 0 : index
    %155 = vector.load %arg11[%c0_49, %c0_50] : memref<1x128xf32, #tpu.memory_space<vmem>>, vector<1x128xf32>
    %156 = vector.broadcast %155 : vector<1x128xf32> to vector<16x128xf32>
    %157 = arith.addf %154, %156 : vector<16x128xf32>
    %158 = arith.negf %157 : vector<16x128xf32>
    %159 = math.exp %158 : vector<16x128xf32>
    %cst_51 = arith.constant 1.000000e+00 : f32
    %160 = vector.broadcast %cst_51 : f32 to vector<16x128xf32>
    %161 = arith.addf %160, %159 : vector<16x128xf32>
    %162 = arith.divf %160, %161 : vector<16x128xf32>
    %163 = arith.mulf %157, %162 : vector<16x128xf32>
    %164 = tpu.iota {dimensions = array<i32: 0>} : vector<32x16xi32>
    %165 = tpu.iota {dimensions = array<i32: 1>} : vector<32x16xi32>
    %c2_i32_52 = arith.constant 2 : i32
    %166 = vector.broadcast %c2_i32_52 : i32 to vector<32x16xi32>
    %167 = arith.muli %166, %165 : vector<32x16xi32>
    %168 = arith.cmpi eq, %164, %167 : vector<32x16xi32>
    %c2_i32_53 = arith.constant 2 : i32
    %169 = vector.broadcast %c2_i32_53 : i32 to vector<32x16xi32>
    %170 = arith.muli %169, %165 : vector<32x16xi32>
    %c1_i32_54 = arith.constant 1 : i32
    %171 = vector.broadcast %c1_i32_54 : i32 to vector<32x16xi32>
    %172 = arith.addi %170, %171 : vector<32x16xi32>
    %173 = arith.cmpi eq, %164, %172 : vector<32x16xi32>
    %174 = arith.ori %168, %173 : vector<32x16xi1>
    %cst_55 = arith.constant 1.000000e+00 : f32
    %cst_56 = arith.constant 0.000000e+00 : f32
    %175 = vector.broadcast %cst_55 : f32 to vector<32x16xf32>
    %176 = vector.broadcast %cst_56 : f32 to vector<32x16xf32>
    %177 = arith.select %174, %175, %176 : vector<32x16xi1>, vector<32x16xf32>
    %178 = arith.truncf %177 : vector<32x16xf32> to vector<32x16xbf16>
    %179 = arith.truncf %163 : vector<16x128xf32> to vector<16x128xbf16>
    %cst_57 = arith.constant dense<0.000000e+00> : vector<32x128xf32>
    %180 = tpu.matmul %178, %179, %cst_57 {dimension_numbers = #tpu.dot_dimension_numbers<[1], [0], [0], [1], [0, 0, 1, 1], [], []>} : vector<32x16xbf16>, vector<16x128xbf16>, vector<32x128xf32> -> vector<32x128xf32>
    %c1_i32_58 = arith.constant 1 : i32
    %181 = tpu.dynamic_rotate %180 by %c1_i32_58 dim 0 : vector<32x128xf32>, i32 -> vector<32x128xf32>
    %c31_i32_59 = arith.constant 31 : i32
    %182 = tpu.dynamic_rotate %180 by %c31_i32_59 dim 0 : vector<32x128xf32>, i32 -> vector<32x128xf32>
    %183 = tpu.iota {dimensions = array<i32: 0>} : vector<32x1xi32>
    %c15_i32_60 = arith.constant 15 : i32
    %184 = vector.broadcast %c15_i32_60 : i32 to vector<32x1xi32>
    %185 = arith.andi %183, %184 : vector<32x1xi32>
    %c0_i32_61 = arith.constant 0 : i32
    %186 = vector.broadcast %c0_i32_61 : i32 to vector<32x1xi32>
    %187 = arith.cmpi eq, %185, %186 : vector<32x1xi32>
    %cst_62 = arith.constant 0.000000e+00 : f32
    %188 = vector.shape_cast %187 : vector<32x1xi1> to vector<32x1xi1>
    %189 = vector.broadcast %188 : vector<32x1xi1> to vector<32x128xi1>
    %190 = vector.broadcast %cst_62 : f32 to vector<32x128xf32>
    %191 = arith.select %189, %190, %181 : vector<32x128xi1>, vector<32x128xf32>
    %c15_i32_63 = arith.constant 15 : i32
    %192 = vector.broadcast %c15_i32_63 : i32 to vector<32x1xi32>
    %193 = arith.cmpi eq, %185, %192 : vector<32x1xi32>
    %cst_64 = arith.constant 0.000000e+00 : f32
    %194 = vector.shape_cast %193 : vector<32x1xi1> to vector<32x1xi1>
    %195 = vector.broadcast %194 : vector<32x1xi1> to vector<32x128xi1>
    %196 = vector.broadcast %cst_64 : f32 to vector<32x128xf32>
    %197 = arith.select %195, %196, %182 : vector<32x128xi1>, vector<32x128xf32>
    %c32_i32_65 = arith.constant 32 : i32
    %198 = tpu.dynamic_rotate %180 by %c32_i32_65 dim 1 : vector<32x128xf32>, i32 -> vector<32x128xf32>
    %199 = arith.addf %191, %198 : vector<32x128xf32>
    %c64_i32_66 = arith.constant 64 : i32
    %200 = tpu.dynamic_rotate %197 by %c64_i32_66 dim 1 : vector<32x128xf32>, i32 -> vector<32x128xf32>
    %201 = arith.addf %199, %200 : vector<32x128xf32>
    %202 = arith.truncf %201 : vector<32x128xf32> to vector<32x128xbf16>
    %c0_67 = arith.constant 0 : index
    %c0_68 = arith.constant 0 : index
    %203 = vector.load %arg12[%c0_67, %c0_68] : memref<128x128xbf16, #tpu.memory_space<vmem>>, vector<128x128xbf16>
    %cst_69 = arith.constant dense<0.000000e+00> : vector<32x128xf32>
    %204 = tpu.matmul %202, %203, %cst_69 {dimension_numbers = #tpu.dot_dimension_numbers<[1], [0], [0], [1], [0, 0, 1, 1], [], []>} : vector<32x128xbf16>, vector<128x128xbf16>, vector<32x128xf32> -> vector<32x128xf32>
    %c0_70 = arith.constant 0 : index
    %c0_71 = arith.constant 0 : index
    %205 = vector.load %arg13[%c0_70, %c0_71] : memref<128x128xbf16, #tpu.memory_space<vmem>>, vector<128x128xbf16>
    %cst_72 = arith.constant dense<0.000000e+00> : vector<32x128xf32>
    %206 = tpu.matmul %108, %205, %cst_72 {dimension_numbers = #tpu.dot_dimension_numbers<[1], [0], [0], [1], [0, 0, 1, 1], [], []>} : vector<32x128xbf16>, vector<128x128xbf16>, vector<32x128xf32> -> vector<32x128xf32>
    %207 = arith.addf %204, %206 : vector<32x128xf32>
    %c0_73 = arith.constant 0 : index
    %c0_74 = arith.constant 0 : index
    %208 = vector.load %arg14[%c0_73, %c0_74] : memref<1x128xf32, #tpu.memory_space<vmem>>, vector<1x128xf32>
    %209 = vector.broadcast %208 : vector<1x128xf32> to vector<32x128xf32>
    %210 = arith.addf %207, %209 : vector<32x128xf32>
    %211 = arith.negf %210 : vector<32x128xf32>
    %212 = math.exp %211 : vector<32x128xf32>
    %cst_75 = arith.constant 1.000000e+00 : f32
    %213 = vector.broadcast %cst_75 : f32 to vector<32x128xf32>
    %214 = arith.addf %213, %212 : vector<32x128xf32>
    %215 = arith.divf %213, %214 : vector<32x128xf32>
    %216 = arith.mulf %210, %215 : vector<32x128xf32>
    %c1_i32_76 = arith.constant 1 : i32
    %217 = tpu.dynamic_rotate %216 by %c1_i32_76 dim 0 : vector<32x128xf32>, i32 -> vector<32x128xf32>
    %c31_i32_77 = arith.constant 31 : i32
    %218 = tpu.dynamic_rotate %216 by %c31_i32_77 dim 0 : vector<32x128xf32>, i32 -> vector<32x128xf32>
    %219 = tpu.iota {dimensions = array<i32: 0>} : vector<32x1xi32>
    %c15_i32_78 = arith.constant 15 : i32
    %220 = vector.broadcast %c15_i32_78 : i32 to vector<32x1xi32>
    %221 = arith.andi %219, %220 : vector<32x1xi32>
    %c0_i32_79 = arith.constant 0 : i32
    %222 = vector.broadcast %c0_i32_79 : i32 to vector<32x1xi32>
    %223 = arith.cmpi eq, %221, %222 : vector<32x1xi32>
    %cst_80 = arith.constant 0.000000e+00 : f32
    %224 = vector.shape_cast %223 : vector<32x1xi1> to vector<32x1xi1>
    %225 = vector.broadcast %224 : vector<32x1xi1> to vector<32x128xi1>
    %226 = vector.broadcast %cst_80 : f32 to vector<32x128xf32>
    %227 = arith.select %225, %226, %217 : vector<32x128xi1>, vector<32x128xf32>
    %c15_i32_81 = arith.constant 15 : i32
    %228 = vector.broadcast %c15_i32_81 : i32 to vector<32x1xi32>
    %229 = arith.cmpi eq, %221, %228 : vector<32x1xi32>
    %cst_82 = arith.constant 0.000000e+00 : f32
    %230 = vector.shape_cast %229 : vector<32x1xi1> to vector<32x1xi1>
    %231 = vector.broadcast %230 : vector<32x1xi1> to vector<32x128xi1>
    %232 = vector.broadcast %cst_82 : f32 to vector<32x128xf32>
    %233 = arith.select %231, %232, %218 : vector<32x128xi1>, vector<32x128xf32>
    %c32_i32_83 = arith.constant 32 : i32
    %234 = tpu.dynamic_rotate %216 by %c32_i32_83 dim 1 : vector<32x128xf32>, i32 -> vector<32x128xf32>
    %235 = arith.addf %227, %234 : vector<32x128xf32>
    %c64_i32_84 = arith.constant 64 : i32
    %236 = tpu.dynamic_rotate %233 by %c64_i32_84 dim 1 : vector<32x128xf32>, i32 -> vector<32x128xf32>
    %237 = arith.addf %235, %236 : vector<32x128xf32>
    %238 = arith.truncf %237 : vector<32x128xf32> to vector<32x128xbf16>
    %c0_85 = arith.constant 0 : index
    %c0_86 = arith.constant 0 : index
    %239 = vector.load %arg15[%c0_85, %c0_86] : memref<128x128xbf16, #tpu.memory_space<vmem>>, vector<128x128xbf16>
    %cst_87 = arith.constant dense<0.000000e+00> : vector<32x128xf32>
    %240 = tpu.matmul %238, %239, %cst_87 {dimension_numbers = #tpu.dot_dimension_numbers<[1], [0], [0], [1], [0, 0, 1, 1], [], []>} : vector<32x128xbf16>, vector<128x128xbf16>, vector<32x128xf32> -> vector<32x128xf32>
    %c0_88 = arith.constant 0 : index
    %c0_89 = arith.constant 0 : index
    %241 = vector.load %arg16[%c0_88, %c0_89] : memref<1x128xf32, #tpu.memory_space<vmem>>, vector<1x128xf32>
    %242 = vector.broadcast %241 : vector<1x128xf32> to vector<32x128xf32>
    %243 = arith.addf %240, %242 : vector<32x128xf32>
    %244 = arith.subf %243, %1 : vector<32x128xf32>
    %245 = arith.mulf %244, %244 : vector<32x128xf32>
    %246 = vector.shape_cast %245 : vector<32x128xf32> to vector<1x32x128xf32>
    %cst_90 = arith.constant dense<0.000000e+00> : vector<1xf32>
    %247 = vector.multi_reduction <add>, %246, %cst_90 [1, 2] : vector<1x32x128xf32> to vector<1xf32>
    %248 = vector.shape_cast %247 : vector<1xf32> to vector<1x1x1xf32>
    %249 = vector.extract %248[0, 0, 0] : f32 from vector<1x1x1xf32>
    %cst_91 = arith.constant 7.812500e-03 : f32
    %250 = arith.mulf %249, %cst_91 : f32
    %c0_92 = arith.constant 0 : index
    %c0_93 = arith.constant 0 : index
    %251 = memref.load %arg17[%c0_92, %c0_93] : memref<1x1xf32, #tpu.memory_space<smem>>
    memref.store %250, %arg17[%c0_92, %c0_93] : memref<1x1xf32, #tpu.memory_space<smem>>
    return
  }
}

</mosaic_0001>

<llo_original>
// kernel: ldm_unet_loss.1
$region0: #{ldm_unet_loss.1}
  #allocation0 [shape = 'u32[]', space=smem, size = 0x4, offset = 0x4, fixed_abs, tag = 'smem constant byte address 0x4 - core index']
  #allocation1 [shape = 'u32[144,128]{1,0:T(1,128)}', space=vmem, size = 0x12000, scoped, tag = 'internal scratch']
  %s0 = inlined_call_operand.vmem [shape: s32[2], index: 0, kind: input, shape index: {}]
  %s1 = inlined_call_operand.vmem [shape: f32[50], index: 1, kind: input, shape index: {}]
  %s2 = inlined_call_operand.vmem [shape: f32[50], index: 2, kind: input, shape index: {}]
  %s3 = inlined_call_operand.vmem [shape: f32[32,128], index: 3, kind: input, shape index: {}]
  %s4 = inlined_call_operand.vmem [shape: f32[32,128], index: 4, kind: input, shape index: {}]
  %s5 = inlined_call_operand.hbm [shape: f32[50,128], index: 5, kind: input, shape index: {}]
  %s6 = inlined_call_operand.vmem [shape: bf16[128,128], index: 6, kind: input, shape index: {}]
  %s7 = inlined_call_operand.hbm [shape: f32[1,128], index: 7, kind: input, shape index: {}]
  %s8 = inlined_call_operand.vmem [shape: bf16[128,128], index: 8, kind: input, shape index: {}]
  %s9 = inlined_call_operand.hbm [shape: f32[1,128], index: 9, kind: input, shape index: {}]
  %s10 = inlined_call_operand.vmem [shape: bf16[128,128], index: 10, kind: input, shape index: {}]
  %s11 = inlined_call_operand.hbm [shape: f32[1,128], index: 11, kind: input, shape index: {}]
  %s12 = inlined_call_operand.vmem [shape: bf16[128,128], index: 12, kind: input, shape index: {}]
  %s13 = inlined_call_operand.hbm [shape: bf16[128,128], index: 13, kind: input, shape index: {}]
  %s14 = inlined_call_operand.hbm [shape: f32[1,128], index: 14, kind: input, shape index: {}]
  %s15 = inlined_call_operand.hbm [shape: bf16[128,128], index: 15, kind: input, shape index: {}]
  %s16 = inlined_call_operand.hbm [shape: f32[1,128], index: 16, kind: input, shape index: {}]
  %s17 = inlined_call_operand.hbm [shape: f32[1,1], index: 17, kind: output, shape index: {}]
  %s18 = sld [smem:[#allocation0]]
  $region122: #{ldm_unet_loss.1} parent=0
    _
  %s20 = ssub.s32 1, %s18
  %s21 = scalar_select 0, %s20, %s18
  $region1: #{ldm_unet_loss.1} parent=0
    #allocation2 [shape = 'u8[512]{0}', space=smem, size = 0x200, scoped, tag = 'input window, operand 0, single buffered']
    #allocation3 [shape = 's32[1]{0}', space=sflag, size = 0x4, scoped, tag = 'scoped memory for ldm_unet_loss.1']
    #allocation4 [shape = 's32[1]{0}', space=sflag, size = 0x4, scoped, tag = 'scoped memory for ldm_unet_loss.1']
    #allocation5 [shape = 's32[1]{0}', space=sflag, size = 0x4, scoped, tag = 'scoped memory for ldm_unet_loss.1']
    #allocation6 [shape = 'u8[512]{0}', space=smem, size = 0x200, scoped, tag = 'input window, operand 1, single buffered']
    #allocation7 [shape = 's32[1]{0}', space=sflag, size = 0x4, scoped, tag = 'scoped memory for ldm_unet_loss.1']
    #allocation8 [shape = 'u8[512]{0}', space=smem, size = 0x200, scoped, tag = 'input window, operand 2, single buffered']
    #allocation9 [shape = 'u8[28672]{0}', space=vmem, size = 0x7000, scoped, tag = 'input window, operand 5, single buffered']
    #allocation10 [shape = 'u8[512]{0}', space=vmem, size = 0x400, scoped, tag = 'input window, operand 7, single buffered']
    #allocation11 [shape = 's32[1]{0}', space=sflag, size = 0x4, scoped, tag = 'scoped memory for ldm_unet_loss.1']
    #allocation12 [shape = 'u8[512]{0}', space=vmem, size = 0x400, scoped, tag = 'input window, operand 9, single buffered']
    #allocation13 [shape = 'u8[512]{0}', space=vmem, size = 0x400, scoped, tag = 'input window, operand 11, single buffered']
    #allocation14 [shape = 's32[1]{0}', space=sflag, size = 0x4, scoped, tag = 'scoped memory for ldm_unet_loss.1']
    #allocation15 [shape = 'u8[32768]{0}', space=vmem, size = 0x8000, scoped, tag = 'input window, operand 13, single buffered']
    #allocation16 [shape = 'u8[512]{0}', space=vmem, size = 0x400, scoped, tag = 'input window, operand 14, single buffered']
    #allocation17 [shape = 's32[1]{0}', space=sflag, size = 0x4, scoped, tag = 'scoped memory for ldm_unet_loss.1']
    #allocation18 [shape = 'u8[32768]{0}', space=vmem, size = 0x8000, scoped, tag = 'input window, operand 15, single buffered']
    #allocation19 [shape = 'u8[512]{0}', space=vmem, size = 0x400, scoped, tag = 'input window, operand 16, single buffered']
    #allocation20 [shape = 's32[1]{0}', space=sflag, size = 0x4, scoped, tag = 'scoped memory for ldm_unet_loss.1']
    #allocation21 [shape = 'u8[512]{0}', space=smem, size = 0x200, scoped, tag = 'output window, operand 0, single buffered']
    %22 = vsyncpa [#allocation5], 0
    %23 = vsyncpa [#allocation7], 0
    %24 = vsyncpa [#allocation3], 0
    %25 = vsyncpa [#allocation11], 0
    %26 = vsyncpa [#allocation14], 0
    %27 = vsyncpa [#allocation17], 0
    %28 = vsyncpa [#allocation20], 0
    %29 = vsyncpa [#allocation4], 0
    // Predicated region
    $region2: #{ldm_unet_loss.1} parent=1 // pred_check
      _
    $region3: #{ldm_unet_loss.1} parent=1 // pred_check_branch
      %31 = sbr.rel (0) target = $region5
    $region4: #{ldm_unet_loss.1} parent=1 // pred_region
      %s33 = ssub.s32 16, 16
      %34 = vsyncadd [#allocation5], %s33
      %s36 = sshll.u32 %s0, 4
      %s37 = int_to_ptr.vmem [resolvable:$true] %s36
      %39 = dma.vmem_to_smem %s37, 16, [#allocation2], [#allocation5]
    $region5: #{ldm_unet_loss.1} parent=1 // pred_fallthru
      _
    // Predicated region
    $region6: #{ldm_unet_loss.1} parent=1 // pred_check
      _
    $region7: #{ldm_unet_loss.1} parent=1 // pred_check_branch
      %41 = sbr.rel (0) target = $region9
    $region8: #{ldm_unet_loss.1} parent=1 // pred_region
      %s43 = ssub.s32 16, 16
      %44 = vsyncadd [#allocation7], %s43
      %s46 = sshll.u32 %s1, 4
      %s47 = int_to_ptr.vmem [resolvable:$true] %s46
      %49 = dma.vmem_to_smem %s47, 16, [#allocation6], [#allocation7]
    $region9: #{ldm_unet_loss.1} parent=1 // pred_fallthru
      _
    // Predicated region
    $region10: #{ldm_unet_loss.1} parent=1 // pred_check
      _
    $region11: #{ldm_unet_loss.1} parent=1 // pred_check_branch
      %51 = sbr.rel (0) target = $region13
    $region12: #{ldm_unet_loss.1} parent=1 // pred_region
      %s53 = ssub.s32 16, 16
      %54 = vsyncadd [#allocation7], %s53
      %s56 = sshll.u32 %s2, 4
      %s57 = int_to_ptr.vmem [resolvable:$true] %s56
      %59 = dma.vmem_to_smem %s57, 16, [#allocation8], [#allocation7]
    $region13: #{ldm_unet_loss.1} parent=1 // pred_fallthru
      _
    // Predicated region
    $region14: #{ldm_unet_loss.1} parent=1 // pred_check
      _
    $region15: #{ldm_unet_loss.1} parent=1 // pred_check_branch
      %61 = sbr.rel (0) target = $region17
    $region16: #{ldm_unet_loss.1} parent=1 // pred_region
      _
    $region17: #{ldm_unet_loss.1} parent=1 // pred_fallthru
      _
    // Predicated region
    $region18: #{ldm_unet_loss.1} parent=1 // pred_check
      _
    $region19: #{ldm_unet_loss.1} parent=1 // pred_check_branch
      %63 = sbr.rel (0) target = $region21
    $region20: #{ldm_unet_loss.1} parent=1 // pred_region
      _
    $region21: #{ldm_unet_loss.1} parent=1 // pred_fallthru
      _
    // Predicated region
    $region22: #{ldm_unet_loss.1} parent=1 // pred_check
      _
    $region23: #{ldm_unet_loss.1} parent=1 // pred_check_branch
      %65 = sbr.rel (0) target = $region25
    $region24: #{ldm_unet_loss.1} parent=1 // pred_region
      %s67 = ssub.s32 896, 896
      %68 = vsyncadd [#allocation3], %s67
      %s69 = sshll.u32 [#allocation9], 4
      %s70 = int_to_ptr.vmem [resolvable:$true] %s69
      %75 = dma.hbm_to_vmem [thread:$0]  %s5, 896, %s70, [#allocation3], 128, 128, 8
    $region25: #{ldm_unet_loss.1} parent=1 // pred_fallthru
      _
    // Predicated region
    $region26: #{ldm_unet_loss.1} parent=1 // pred_check
      _
    $region27: #{ldm_unet_loss.1} parent=1 // pred_check_branch
      %77 = sbr.rel (0) target = $region29
    $region28: #{ldm_unet_loss.1} parent=1 // pred_region
      _
    $region29: #{ldm_unet_loss.1} parent=1 // pred_fallthru
      _
    // Predicated region
    $region30: #{ldm_unet_loss.1} parent=1 // pred_check
      _
    $region31: #{ldm_unet_loss.1} parent=1 // pred_check_branch
      %79 = sbr.rel (0) target = $region33
    $region32: #{ldm_unet_loss.1} parent=1 // pred_region
      %s81 = ssub.s32 16, 16
      %82 = vsyncadd [#allocation11], %s81
      %s84 = sshll.u32 [#allocation10], 4
      %s85 = int_to_ptr.vmem [resolvable:$true] %s84
      %87 = dma.hbm_to_vmem [thread:$0]  %s7, 16, %s85, [#allocation11]
    $region33: #{ldm_unet_loss.1} parent=1 // pred_fallthru
      _
    // Predicated region
    $region34: #{ldm_unet_loss.1} parent=1 // pred_check
      _
    $region35: #{ldm_unet_loss.1} parent=1 // pred_check_branch
      %89 = sbr.rel (0) target = $region37
    $region36: #{ldm_unet_loss.1} parent=1 // pred_region
      _
    $region37: #{ldm_unet_loss.1} parent=1 // pred_fallthru
      _
    // Predicated region
    $region38: #{ldm_unet_loss.1} parent=1 // pred_check
      _
    $region39: #{ldm_unet_loss.1} parent=1 // pred_check_branch
      %91 = sbr.rel (0) target = $region41
    $region40: #{ldm_unet_loss.1} parent=1 // pred_region
      %s93 = ssub.s32 16, 16
      %94 = vsyncadd [#allocation11], %s93
      %s96 = sshll.u32 [#allocation12], 4
      %s97 = int_to_ptr.vmem [resolvable:$true] %s96
      %99 = dma.hbm_to_vmem [thread:$0]  %s9, 16, %s97, [#allocation11]
    $region41: #{ldm_unet_loss.1} parent=1 // pred_fallthru
      _
    // Predicated region
    $region42: #{ldm_unet_loss.1} parent=1 // pred_check
      _
    $region43: #{ldm_unet_loss.1} parent=1 // pred_check_branch
      %101 = sbr.rel (0) target = $region45
    $region44: #{ldm_unet_loss.1} parent=1 // pred_region
      _
    $region45: #{ldm_unet_loss.1} parent=1 // pred_fallthru
      _
    // Predicated region
    $region46: #{ldm_unet_loss.1} parent=1 // pred_check
      _
    $region47: #{ldm_unet_loss.1} parent=1 // pred_check_branch
      %103 = sbr.rel (0) target = $region49
    $region48: #{ldm_unet_loss.1} parent=1 // pred_region
      %s105 = ssub.s32 16, 16
      %106 = vsyncadd [#allocation14], %s105
      %s108 = sshll.u32 [#allocation13], 4
      %s109 = int_to_ptr.vmem [resolvable:$true] %s108
      %111 = dma.hbm_to_vmem [thread:$0]  %s11, 16, %s109, [#allocation14]
    $region49: #{ldm_unet_loss.1} parent=1 // pred_fallthru
      _
    // Predicated region
    $region50: #{ldm_unet_loss.1} parent=1 // pred_check
      _
    $region51: #{ldm_unet_loss.1} parent=1 // pred_check_branch
      %113 = sbr.rel (0) target = $region53
    $region52: #{ldm_unet_loss.1} parent=1 // pred_region
      _
    $region53: #{ldm_unet_loss.1} parent=1 // pred_fallthru
      _
    // Predicated region
    $region54: #{ldm_unet_loss.1} parent=1 // pred_check
      _
    $region55: #{ldm_unet_loss.1} parent=1 // pred_check_branch
      %115 = sbr.rel (0) target = $region57
    $region56: #{ldm_unet_loss.1} parent=1 // pred_region
      %s117 = ssub.s32 1024, 1024
      %118 = vsyncadd [#allocation14], %s117
      %s119 = sshll.u32 [#allocation15], 4
      %s120 = int_to_ptr.vmem [resolvable:$true] %s119
      %125 = dma.hbm_to_vmem [thread:$0]  %s13, 1024, %s120, [#allocation14], 64, 64, 4
    $region57: #{ldm_unet_loss.1} parent=1 // pred_fallthru
      _
    // Predicated region
    $region58: #{ldm_unet_loss.1} parent=1 // pred_check
      _
    $region59: #{ldm_unet_loss.1} parent=1 // pred_check_branch
      %127 = sbr.rel (0) target = $region61
    $region60: #{ldm_unet_loss.1} parent=1 // pred_region
      %s129 = ssub.s32 16, 16
      %130 = vsyncadd [#allocation17], %s129
      %s132 = sshll.u32 [#allocation16], 4
      %s133 = int_to_ptr.vmem [resolvable:$true] %s132
      %135 = dma.hbm_to_vmem [thread:$0]  %s14, 16, %s133, [#allocation17]
    $region61: #{ldm_unet_loss.1} parent=1 // pred_fallthru
      _
    // Predicated region
    $region62: #{ldm_unet_loss.1} parent=1 // pred_check
      _
    $region63: #{ldm_unet_loss.1} parent=1 // pred_check_branch
      %137 = sbr.rel (0) target = $region65
    $region64: #{ldm_unet_loss.1} parent=1 // pred_region
      %s139 = ssub.s32 1024, 1024
      %140 = vsyncadd [#allocation17], %s139
      %s141 = sshll.u32 [#allocation18], 4
      %s142 = int_to_ptr.vmem [resolvable:$true] %s141
      %147 = dma.hbm_to_vmem [thread:$0]  %s15, 1024, %s142, [#allocation17], 64, 64, 4
    $region65: #{ldm_unet_loss.1} parent=1 // pred_fallthru
      _
    // Predicated region
    $region66: #{ldm_unet_loss.1} parent=1 // pred_check
      _
    $region67: #{ldm_unet_loss.1} parent=1 // pred_check_branch
      %149 = sbr.rel (0) target = $region69
    $region68: #{ldm_unet_loss.1} parent=1 // pred_region
      %s151 = ssub.s32 16, 16
      %152 = vsyncadd [#allocation20], %s151
      %s154 = sshll.u32 [#allocation19], 4
      %s155 = int_to_ptr.vmem [resolvable:$true] %s154
      %157 = dma.hbm_to_vmem [thread:$0]  %s16, 16, %s155, [#allocation20]
    $region69: #{ldm_unet_loss.1} parent=1 // pred_fallthru
      _
    // Predicated region
    $region70: #{ldm_unet_loss.1} parent=1 // pred_check
      _
    $region71: #{ldm_unet_loss.1} parent=1 // pred_check_branch
      %159 = sbr.rel (0) target = $region73
    $region72: #{ldm_unet_loss.1} parent=1 // pred_region
      %160 = dma.done [#allocation5], 16
    $region73: #{ldm_unet_loss.1} parent=1 // pred_fallthru
      _
    // Predicated region
    $region74: #{ldm_unet_loss.1} parent=1 // pred_check
      _
    $region75: #{ldm_unet_loss.1} parent=1 // pred_check_branch
      %162 = sbr.rel (0) target = $region77
    $region76: #{ldm_unet_loss.1} parent=1 // pred_region
      %163 = dma.done [#allocation7], 16
    $region77: #{ldm_unet_loss.1} parent=1 // pred_fallthru
      _
    // Predicated region
    $region78: #{ldm_unet_loss.1} parent=1 // pred_check
      _
    $region79: #{ldm_unet_loss.1} parent=1 // pred_check_branch
      %165 = sbr.rel (0) target = $region81
    $region80: #{ldm_unet_loss.1} parent=1 // pred_region
      %166 = dma.done [#allocation7], 16
    $region81: #{ldm_unet_loss.1} parent=1 // pred_fallthru
      _
    // Predicated region
    $region82: #{ldm_unet_loss.1} parent=1 // pred_check
      _
    $region83: #{ldm_unet_loss.1} parent=1 // pred_check_branch
      %168 = sbr.rel (0) target = $region85
    $region84: #{ldm_unet_loss.1} parent=1 // pred_region
      %169 = dma.done [#allocation3], 896
    $region85: #{ldm_unet_loss.1} parent=1 // pred_fallthru
      _
    // Predicated region
    $region86: #{ldm_unet_loss.1} parent=1 // pred_check
      _
    $region87: #{ldm_unet_loss.1} parent=1 // pred_check_branch
      %171 = sbr.rel (0) target = $region89
    $region88: #{ldm_unet_loss.1} parent=1 // pred_region
      %172 = dma.done [#allocation11], 16
    $region89: #{ldm_unet_loss.1} parent=1 // pred_fallthru
      _
    // Predicated region
    $region90: #{ldm_unet_loss.1} parent=1 // pred_check
      _
    $region91: #{ldm_unet_loss.1} parent=1 // pred_check_branch
      %174 = sbr.rel (0) target = $region93
    $region92: #{ldm_unet_loss.1} parent=1 // pred_region
      %175 = dma.done [#allocation11], 16
    $region93: #{ldm_unet_loss.1} parent=1 // pred_fallthru
      _
    // Predicated region
    $region94: #{ldm_unet_loss.1} parent=1 // pred_check
      _
    $region95: #{ldm_unet_loss.1} parent=1 // pred_check_branch
      %177 = sbr.rel (0) target = $region97
    $region96: #{ldm_unet_loss.1} parent=1 // pred_region
      %178 = dma.done [#allocation14], 16
    $region97: #{ldm_unet_loss.1} parent=1 // pred_fallthru
      _
    // Predicated region
    $region98: #{ldm_unet_loss.1} parent=1 // pred_check
      _
    $region99: #{ldm_unet_loss.1} parent=1 // pred_check_branch
      %180 = sbr.rel (0) target = $region101
    $region100: #{ldm_unet_loss.1} parent=1 // pred_region
      %181 = dma.done [#allocation14], 1024
    $region101: #{ldm_unet_loss.1} parent=1 // pred_fallthru
      _
    // Predicated region
    $region102: #{ldm_unet_loss.1} parent=1 // pred_check
      _
    $region103: #{ldm_unet_loss.1} parent=1 // pred_check_branch
      %183 = sbr.rel (0) target = $region105
    $region104: #{ldm_unet_loss.1} parent=1 // pred_region
      %184 = dma.done [#allocation17], 16
    $region105: #{ldm_unet_loss.1} parent=1 // pred_fallthru
      _
    // Predicated region
    $region106: #{ldm_unet_loss.1} parent=1 // pred_check
      _
    $region107: #{ldm_unet_loss.1} parent=1 // pred_check_branch
      %186 = sbr.rel (0) target = $region109
    $region108: #{ldm_unet_loss.1} parent=1 // pred_region
      %187 = dma.done [#allocation17], 1024
    $region109: #{ldm_unet_loss.1} parent=1 // pred_fallthru
      _
    // Predicated region
    $region110: #{ldm_unet_loss.1} parent=1 // pred_check
      _
    $region111: #{ldm_unet_loss.1} parent=1 // pred_check_branch
      %189 = sbr.rel (0) target = $region113
    $region112: #{ldm_unet_loss.1} parent=1 // pred_region
      %190 = dma.done [#allocation20], 16
    $region113: #{ldm_unet_loss.1} parent=1 // pred_fallthru
      _
    %191 = sfence
    %v193 = vld [vmem:[%s3] sm:$0xff]
    %v194 = vld [vmem:[%s3 + $0x8] sm:$0xff]
    %v195 = vld [vmem:[%s3 + $0x10] sm:$0xff]
    %v196 = vld [vmem:[%s3 + $0x18] sm:$0xff]
    %v197 = vld [vmem:[%s4] sm:$0xff]
    %v198 = vld [vmem:[%s4 + $0x8] sm:$0xff]
    %v199 = vld [vmem:[%s4 + $0x10] sm:$0xff]
    %v200 = vld [vmem:[%s4 + $0x18] sm:$0xff]
    %v201 = vlaneseq
    %v202 = vshrl.u32 %v201, 7
    %v203 = vadd.s32 %v202, 8
    %v204 = vadd.s32 %v202, 16
    %v205 = vadd.s32 %v202, 24
    %s206 = sld [smem:[#allocation2]]
    %vm207 = vcmp.ge.s32.totalorder %v202, 0
    %vm208 = vcmp.ge.s32.totalorder %v203, 0
    %vm209 = vcmp.ge.s32.totalorder %v204, 0
    %vm210 = vcmp.ge.s32.totalorder %v205, 0
    %vm211 = vcmp.lt.s32.totalorder %v202, 16
    %vm212 = vcmp.lt.s32.totalorder %v203, 16
    %vm213 = vcmp.lt.s32.totalorder %v204, 16
    %vm214 = vcmp.lt.s32.totalorder %v205, 16
    %vm215 = vmand %vm207, %vm211
    %vm216 = vmand %vm208, %vm212
    %vm217 = vmand %vm209, %vm213
    %vm218 = vmand %vm210, %vm214
    %s219 = sld [smem:[#allocation6 + %s206]]
    %v220 = vstv %s219
    %v221 = vsel %vm215, %v220, 0.0
    %v222 = vsel %vm216, %v220, 0.0
    %v223 = vsel %vm217, %v220, 0.0
    %v224 = vsel %vm218, %v220, 0.0
    %s225 = sld [smem:[#allocation8 + %s206]]
    %v226 = vstv %s225
    %v227 = vsel %vm215, %v226, 0.0
    %v228 = vsel %vm216, %v226, 0.0
    %v229 = vsel %vm217, %v226, 0.0
    %v230 = vsel %vm218, %v226, 0.0
    %s231 = scalar_lea.vmem [#allocation9], %s206
    %v232 = vld [vmem:[%s231] sm:$0x1]
    %v233 = vsel %vm215, 1, 0
    %v234 = vsel %vm216, 1, 0
    %v235 = vsel %vm217, 1, 0
    %v236 = vsel %vm218, 1, 0
    %vm237 = vcmp.eq.s32.totalorder %v233, 1
    %vm238 = vcmp.eq.s32.totalorder %v234, 1
    %vm239 = vcmp.eq.s32.totalorder %v235, 1
    %vm240 = vcmp.eq.s32.totalorder %v236, 1
    %v241 = vlaneseq
    %v242 = vshrl.u32 %v241, 7
    %v243 = vsub.s32 0, %v242
    %v244 = vrot.slane %v232, %v243
    %v245 = vsel %vm237, %v244, 0.0
    %v246 = vsel %vm238, %v244, 0.0
    %v247 = vsel %vm239, %v244, 0.0
    %v248 = vsel %vm240, %v244, 0.0
    %s249 = sld [smem:[#allocation2 + $0x1]]
    %vm250 = vcmp.ge.s32.totalorder %v202, 16
    %vm251 = vcmp.ge.s32.totalorder %v203, 16
    %vm252 = vcmp.ge.s32.totalorder %v204, 16
    %vm253 = vcmp.ge.s32.totalorder %v205, 16
    %vm254 = vcmp.lt.s32.totalorder %v202, 32
    %vm255 = vcmp.lt.s32.totalorder %v203, 32
    %vm256 = vcmp.lt.s32.totalorder %v204, 32
    %vm257 = vcmp.lt.s32.totalorder %v205, 32
    %vm258 = vmand %vm250, %vm254
    %vm259 = vmand %vm251, %vm255
    %vm260 = vmand %vm252, %vm256
    %vm261 = vmand %vm253, %vm257
    %s262 = sld [smem:[#allocation6 + %s249]]
    %v263 = vstv %s262
    %v264 = vsel %vm258, %v263, %v221
    %v265 = vsel %vm259, %v263, %v222
    %v266 = vsel %vm260, %v263, %v223
    %v267 = vsel %vm261, %v263, %v224
    %s268 = sld [smem:[#allocation8 + %s249]]
    %v269 = vstv %s268
    %v270 = vsel %vm258, %v269, %v227
    %v271 = vsel %vm259, %v269, %v228
    %v272 = vsel %vm260, %v269, %v229
    %v273 = vsel %vm261, %v269, %v230
    %s274 = scalar_lea.vmem [#allocation9], %s249
    %v275 = vld [vmem:[%s274] sm:$0x1]
    %v276 = vsel %vm258, 1, 0
    %v277 = vsel %vm259, 1, 0
    %v278 = vsel %vm260, 1, 0
    %v279 = vsel %vm261, 1, 0
    %vm280 = vcmp.eq.s32.totalorder %v276, 1
    %vm281 = vcmp.eq.s32.totalorder %v277, 1
    %vm282 = vcmp.eq.s32.totalorder %v278, 1
    %vm283 = vcmp.eq.s32.totalorder %v279, 1
    %v284 = vlaneseq
    %v285 = vshrl.u32 %v284, 7
    %v286 = vsub.s32 0, %v285
    %v287 = vrot.slane %v275, %v286
    %v288 = vsel %vm280, %v287, %v245
    %v289 = vsel %vm281, %v287, %v246
    %v290 = vsel %vm282, %v287, %v247
    %v291 = vsel %vm283, %v287, %v248
    %v292 = vmul.f32 %v264, %v193
    %v293 = vmul.f32 %v265, %v194
    %v294 = vmul.f32 %v266, %v195
    %v295 = vmul.f32 %v267, %v196
    %v296 = vmul.f32 %v270, %v197
    %v297 = vmul.f32 %v271, %v198
    %v298 = vmul.f32 %v272, %v199
    %v299 = vmul.f32 %v273, %v200
    %v300 = vadd.f32 %v292, %v296
    %v301 = vadd.f32 %v293, %v297
    %v302 = vadd.f32 %v294, %v298
    %v303 = vadd.f32 %v295, %v299
    %v304 = vadd.f32 %v300, %v288
    %v305 = vadd.f32 %v301, %v289
    %v306 = vadd.f32 %v302, %v290
    %v307 = vadd.f32 %v303, %v291
    %v308 = vrot.slane %v304, 7
    %v309 = vrot.slane %v305, 7
    %v310 = vrot.slane %v306, 7
    %v311 = vrot.slane %v307, 7
    %vm312 = vcmp.lt.s32.totalorder %v202, 1
    %v313 = vsel %vm312, %v310, %v311
    %v314 = vsel %vm312, %v309, %v310
    %v315 = vsel %vm312, %v308, %v309
    %v316 = vsel %vm312, %v311, %v308
    %v317 = vrot.slane %v304, 1
    %v318 = vrot.slane %v305, 1
    %v319 = vrot.slane %v306, 1
    %v320 = vrot.slane %v307, 1
    %vm321 = vcmp.lt.s32.totalorder %v202, 7
    %v322 = vsel %vm321, %v319, %v320
    %v323 = vsel %vm321, %v318, %v319
    %v324 = vsel %vm321, %v317, %v318
    %v325 = vsel %vm321, %v320, %v317
    %v326 = vand.u32 %v202, 15
    %v327 = vand.u32 %v203, 15
    %v328 = vand.u32 %v204, 15
    %v329 = vand.u32 %v205, 15
    %vm330 = vcmp.eq.s32.totalorder %v326, 0
    %vm331 = vcmp.eq.s32.totalorder %v327, 0
    %vm332 = vcmp.eq.s32.totalorder %v328, 0
    %vm333 = vcmp.eq.s32.totalorder %v329, 0
    %v334 = vsel %vm330, 1, 0
    %v335 = vsel %vm331, 1, 0
    %v336 = vsel %vm332, 1, 0
    %v337 = vsel %vm333, 1, 0
    %vm338 = vcmp.eq.s32.totalorder %v334, 1
    %vm339 = vcmp.eq.s32.totalorder %v335, 1
    %vm340 = vcmp.eq.s32.totalorder %v336, 1
    %vm341 = vcmp.eq.s32.totalorder %v337, 1
    %v342 = vsel %vm338, 0.0, %v316
    %v343 = vsel %vm339, 0.0, %v315
    %v344 = vsel %vm340, 0.0, %v314
    %v345 = vsel %vm341, 0.0, %v313
    %vm346 = vcmp.eq.s32.totalorder %v326, 15
    %vm347 = vcmp.eq.s32.totalorder %v327, 15
    %vm348 = vcmp.eq.s32.totalorder %v328, 15
    %vm349 = vcmp.eq.s32.totalorder %v329, 15
    %v350 = vsel %vm346, 1, 0
    %v351 = vsel %vm347, 1, 0
    %v352 = vsel %vm348, 1, 0
    %v353 = vsel %vm349, 1, 0
    %vm354 = vcmp.eq.s32.totalorder %v350, 1
    %vm355 = vcmp.eq.s32.totalorder %v351, 1
    %vm356 = vcmp.eq.s32.totalorder %v352, 1
    %vm357 = vcmp.eq.s32.totalorder %v353, 1
    %v358 = vsel %vm354, 0.0, %v324
    %v359 = vsel %vm355, 0.0, %v323
    %v360 = vsel %vm356, 0.0, %v322
    %v361 = vsel %vm357, 0.0, %v325
    %362 = vrot.lane.b32.xlu0 %v304, 32
    %v363 = vpop.permute.xlu0 %362
    %364 = vrot.lane.b32.xlu0 %v305, 32
    %v365 = vpop.permute.xlu0 %364
    %366 = vrot.lane.b32.xlu0 %v306, 32
    %v367 = vpop.permute.xlu0 %366
    %368 = vrot.lane.b32.xlu0 %v307, 32
    %v369 = vpop.permute.xlu0 %368
    %v370 = vadd.f32 %v342, %v363
    %v371 = vadd.f32 %v343, %v365
    %v372 = vadd.f32 %v344, %v367
    %v373 = vadd.f32 %v345, %v369
    %374 = vrot.lane.b32.xlu0 %v358, 64
    %v375 = vpop.permute.xlu0 %374
    %376 = vrot.lane.b32.xlu0 %v359, 64
    %v377 = vpop.permute.xlu0 %376
    %378 = vrot.lane.b32.xlu0 %v360, 64
    %v379 = vpop.permute.xlu0 %378
    %380 = vrot.lane.b32.xlu0 %v361, 64
    %v381 = vpop.permute.xlu0 %380
    %v382 = vadd.f32 %v370, %v375
    %v383 = vadd.f32 %v371, %v377
    %v384 = vadd.f32 %v372, %v379
    %v385 = vadd.f32 %v373, %v381
    %v386 = vpack.c.bf16 %v383, %v382
    %v387 = vpack.c.bf16 %v385, %v384
    %v388 = vld [vmem:[%s6] sm:$0xf]
    %v389 = vld [vmem:[%s6 + $0x4] sm:$0xf]
    %v390 = vld [vmem:[%s6 + $0x8] sm:$0xf]
    %v391 = vld [vmem:[%s6 + $0xc] sm:$0xf]
    %v392 = vld [vmem:[%s6 + $0x10] sm:$0xf]
    %v393 = vld [vmem:[%s6 + $0x14] sm:$0xf]
    %v394 = vld [vmem:[%s6 + $0x18] sm:$0xf]
    %v395 = vld [vmem:[%s6 + $0x1c] sm:$0xf]
    %v396 = vld [vmem:[%s6 + $0x20] sm:$0xf]
    %v397 = vld [vmem:[%s6 + $0x24] sm:$0xf]
    %v398 = vld [vmem:[%s6 + $0x28] sm:$0xf]
    %v399 = vld [vmem:[%s6 + $0x2c] sm:$0xf]
    %v400 = vld [vmem:[%s6 + $0x30] sm:$0xf]
    %v401 = vld [vmem:[%s6 + $0x34] sm:$0xf]
    %v402 = vld [vmem:[%s6 + $0x38] sm:$0xf]
    %v403 = vld [vmem:[%s6 + $0x3c] sm:$0xf]
    %v404 = vld [vmem:[#allocation10] sm:$0x1]
    %v406 = vlaneseq
    %v407 = vshrl.u32 %v406, 7
    %v408 = vsub.s32 0, %v407
    %v409 = vrot.slane %v404, %v408
    %v427 = vunpack.c.l.b16 %v388
    %v428 = vunpack.c.l.b16 %v389
    %v429 = vunpack.c.l.b16 %v390
    %v430 = vunpack.c.l.b16 %v391
    %v431 = vunpack.c.l.b16 %v392
    %v432 = vunpack.c.l.b16 %v393
    %v433 = vunpack.c.l.b16 %v394
    %v434 = vunpack.c.l.b16 %v395
    %v435 = vunpack.c.l.b16 %v396
    %v436 = vunpack.c.l.b16 %v397
    %v437 = vunpack.c.l.b16 %v398
    %v438 = vunpack.c.l.b16 %v399
    %v439 = vunpack.c.l.b16 %v400
    %v440 = vunpack.c.l.b16 %v401
    %v441 = vunpack.c.l.b16 %v402
    %v442 = vunpack.c.l.b16 %v403
    %v443 = vpack.c.b16 %v428, %v427
    %v444 = vpack.c.b16 %v430, %v429
    %v445 = vpack.c.b16 %v432, %v431
    %v446 = vpack.c.b16 %v434, %v433
    %v447 = vpack.c.b16 %v436, %v435
    %v448 = vpack.c.b16 %v438, %v437
    %v449 = vpack.c.b16 %v440, %v439
    %v450 = vpack.c.b16 %v442, %v441
    %459 = vmatprep.subr.bf16.mxu0 0
    %460 = vmatpush1.bf16.msra.mxu0 %v443
    %461 = vmatprep.subr.bf16.mxu0 0
    %462 = vmatpush1.bf16.msra.mxu0 %v444
    %463 = vmatprep.subr.bf16.mxu0 0
    %464 = vmatpush1.bf16.msra.mxu0 %v445
    %465 = vmatprep.subr.bf16.mxu0 0
    %466 = vmatpush1.bf16.msra.mxu0 %v446
    %467 = vmatprep.subr.bf16.mxu0 0
    %468 = vmatpush1.bf16.msra.mxu0 %v447
    %469 = vmatprep.subr.bf16.mxu0 0
    %470 = vmatpush1.bf16.msra.mxu0 %v448
    %471 = vmatprep.subr.bf16.mxu0 0
    %472 = vmatpush1.bf16.msra.mxu0 %v449
    %473 = vmatprep.subr.bf16.mxu0 0
    %474 = vmatpush1.bf16.msra.mxu0 %v450
    %475 = vmatprep.subr.bf16.mxu0 0
    %476 = vmatpush1.bf16.msra.mxu0 0
    %477 = vmatprep.subr.bf16.mxu0 0
    %478 = vmatpush1.bf16.msra.mxu0 0
    %479 = vmatprep.subr.bf16.mxu0 0
    %480 = vmatpush1.bf16.msra.mxu0 0
    %481 = vmatprep.subr.bf16.mxu0 0
    %482 = vmatpush1.bf16.msra.mxu0 0
    %483 = vmatprep.subr.bf16.mxu0 0
    %484 = vmatpush1.bf16.msra.mxu0 0
    %485 = vmatprep.subr.bf16.mxu0 0
    %486 = vmatpush1.bf16.msra.mxu0 0
    %487 = vmatprep.subr.bf16.mxu0 0
    %488 = vmatpush1.bf16.msra.mxu0 0
    %489 = vmatprep.subr.bf16.mxu0 0
    %490 = vmatpush1.bf16.msra.mxu0 0
    %491 = vmatprep.mubr.bf16.mxu0 0
    %492 = vmatmul.mubr.bf16.gmra.mrb[0].mxu0 %v386
    %v493 = vpop.f32.mrb[0].mxu0
    %v494 = vadd.f32 %v409, %v493
    %v495 = vpop.f32.mrb[0].mxu0
    %v496 = vpop.f32.mrb[0].mxu0
    %v497 = vadd.f32 %v409, %v496
    %v498 = vpop.f32.mrb[0].mxu0
    %499 = vmatprep.mubr.bf16.mxu0 0
    %500 = vmatmul.mubr.bf16.gmra.mrb[0].mxu0 %v387
    %v501 = vpop.f32.mrb[0].mxu0
    %v502 = vadd.f32 %v409, %v501
    %v503 = vpop.f32.mrb[0].mxu0
    %v504 = vpop.f32.mrb[0].mxu0
    %v505 = vadd.f32 %v409, %v504
    %v506 = vpop.f32.mrb[0].mxu0
    %507 = vdwg.mxu0
    %v508 = vxor.u32 %v494, 2147483648
    %v509 = vxor.u32 %v497, 2147483648
    %v510 = vxor.u32 %v502, 2147483648
    %v511 = vxor.u32 %v505, 2147483648
    %v512 = vmul.f32 %v508, 1.442695
    %v513 = vpow.pop %v512
    %v514 = vmul.f32 %v509, 1.442695
    %v515 = vpow.pop %v514
    %v516 = vmul.f32 %v510, 1.442695
    %v517 = vpow.pop %v516
    %v518 = vmul.f32 %v511, 1.442695
    %v519 = vpow.pop %v518
    %v520 = vadd.f32 %v513, 1.0
    %v521 = vadd.f32 %v515, 1.0
    %v522 = vadd.f32 %v517, 1.0
    %v523 = vadd.f32 %v519, 1.0
    %v524 = vrcp.pop %v520
    %v525 = vmul.f32 1.0, %v524
    %v526 = vrcp.pop %v521
    %v527 = vmul.f32 1.0, %v526
    %v528 = vrcp.pop %v522
    %v529 = vmul.f32 1.0, %v528
    %v530 = vrcp.pop %v523
    %v531 = vmul.f32 1.0, %v530
    %v532 = vmul.f32 %v494, %v525
    %v533 = vmul.f32 %v497, %v527
    %v534 = vmul.f32 %v502, %v529
    %v535 = vmul.f32 %v505, %v531
    %v536 = vrot.slane %v532, 7
    %v537 = vrot.slane %v533, 7
    %v538 = vrot.slane %v534, 7
    %v539 = vrot.slane %v535, 7
    %v540 = vsel %vm312, %v538, %v539
    %v541 = vsel %vm312, %v537, %v538
    %v542 = vsel %vm312, %v536, %v537
    %v543 = vsel %vm312, %v539, %v536
    %v544 = vrot.slane %v532, 1
    %v545 = vrot.slane %v533, 1
    %v546 = vrot.slane %v534, 1
    %v547 = vrot.slane %v535, 1
    %v548 = vsel %vm321, %v546, %v547
    %v549 = vsel %vm321, %v545, %v546
    %v550 = vsel %vm321, %v544, %v545
    %v551 = vsel %vm321, %v547, %v544
    %v552 = vsel %vm338, 0.0, %v543
    %v553 = vsel %vm339, 0.0, %v542
    %v554 = vsel %vm340, 0.0, %v541
    %v555 = vsel %vm341, 0.0, %v540
    %v556 = vsel %vm354, 0.0, %v550
    %v557 = vsel %vm355, 0.0, %v549
    %v558 = vsel %vm356, 0.0, %v548
    %v559 = vsel %vm357, 0.0, %v551
    %560 = vrot.lane.b32.xlu0 %v532, 32
    %v561 = vpop.permute.xlu0 %560
    %562 = vrot.lane.b32.xlu0 %v533, 32
    %v563 = vpop.permute.xlu0 %562
    %564 = vrot.lane.b32.xlu0 %v534, 32
    %v565 = vpop.permute.xlu0 %564
    %566 = vrot.lane.b32.xlu0 %v535, 32
    %v567 = vpop.permute.xlu0 %566
    %v568 = vadd.f32 %v552, %v561
    %v569 = vadd.f32 %v553, %v563
    %v570 = vadd.f32 %v554, %v565
    %v571 = vadd.f32 %v555, %v567
    %572 = vrot.lane.b32.xlu0 %v556, 64
    %v573 = vpop.permute.xlu0 %572
    %574 = vrot.lane.b32.xlu0 %v557, 64
    %v575 = vpop.permute.xlu0 %574
    %576 = vrot.lane.b32.xlu0 %v558, 64
    %v577 = vpop.permute.xlu0 %576
    %578 = vrot.lane.b32.xlu0 %v559, 64
    %v579 = vpop.permute.xlu0 %578
    %v580 = vadd.f32 %v568, %v573
    %v581 = vadd.f32 %v569, %v575
    %v582 = vadd.f32 %v570, %v577
    %v583 = vadd.f32 %v571, %v579
    %v584 = vpack.c.bf16 %v581, %v580
    %v585 = vpack.c.bf16 %v583, %v582
    %v586 = vld [vmem:[%s8] sm:$0xf]
    %v587 = vld [vmem:[%s8 + $0x4] sm:$0xf]
    %v588 = vld [vmem:[%s8 + $0x8] sm:$0xf]
    %v589 = vld [vmem:[%s8 + $0xc] sm:$0xf]
    %v590 = vld [vmem:[%s8 + $0x10] sm:$0xf]
    %v591 = vld [vmem:[%s8 + $0x14] sm:$0xf]
    %v592 = vld [vmem:[%s8 + $0x18] sm:$0xf]
    %v593 = vld [vmem:[%s8 + $0x1c] sm:$0xf]
    %v594 = vld [vmem:[%s8 + $0x20] sm:$0xf]
    %v595 = vld [vmem:[%s8 + $0x24] sm:$0xf]
    %v596 = vld [vmem:[%s8 + $0x28] sm:$0xf]
    %v597 = vld [vmem:[%s8 + $0x2c] sm:$0xf]
    %v598 = vld [vmem:[%s8 + $0x30] sm:$0xf]
    %v599 = vld [vmem:[%s8 + $0x34] sm:$0xf]
    %v600 = vld [vmem:[%s8 + $0x38] sm:$0xf]
    %v601 = vld [vmem:[%s8 + $0x3c] sm:$0xf]
    %v602 = vld [vmem:[#allocation12] sm:$0x1]
    %v604 = vlaneseq
    %v605 = vshrl.u32 %v604, 7
    %v606 = vsub.s32 0, %v605
    %v607 = vrot.slane %v602, %v606
    %v625 = vunpack.c.l.b16 %v586
    %v626 = vunpack.c.l.b16 %v587
    %v627 = vunpack.c.l.b16 %v588
    %v628 = vunpack.c.l.b16 %v589
    %v629 = vunpack.c.l.b16 %v590
    %v630 = vunpack.c.l.b16 %v591
    %v631 = vunpack.c.l.b16 %v592
    %v632 = vunpack.c.l.b16 %v593
    %v633 = vunpack.c.l.b16 %v594
    %v634 = vunpack.c.l.b16 %v595
    %v635 = vunpack.c.l.b16 %v596
    %v636 = vunpack.c.l.b16 %v597
    %v637 = vunpack.c.l.b16 %v598
    %v638 = vunpack.c.l.b16 %v599
    %v639 = vunpack.c.l.b16 %v600
    %v640 = vunpack.c.l.b16 %v601
    %v641 = vpack.c.b16 %v626, %v625
    %v642 = vpack.c.b16 %v628, %v627
    %v643 = vpack.c.b16 %v630, %v629
    %v644 = vpack.c.b16 %v632, %v631
    %v645 = vpack.c.b16 %v634, %v633
    %v646 = vpack.c.b16 %v636, %v635
    %v647 = vpack.c.b16 %v638, %v637
    %v648 = vpack.c.b16 %v640, %v639
    %657 = vmatprep.subr.bf16.mxu0 0
    %658 = vmatpush1.bf16.msra.mxu0 %v641
    %659 = vmatprep.subr.bf16.mxu0 0
    %660 = vmatpush1.bf16.msra.mxu0 %v642
    %661 = vmatprep.subr.bf16.mxu0 0
    %662 = vmatpush1.bf16.msra.mxu0 %v643
    %663 = vmatprep.subr.bf16.mxu0 0
    %664 = vmatpush1.bf16.msra.mxu0 %v644
    %665 = vmatprep.subr.bf16.mxu0 0
    %666 = vmatpush1.bf16.msra.mxu0 %v645
    %667 = vmatprep.subr.bf16.mxu0 0
    %668 = vmatpush1.bf16.msra.mxu0 %v646
    %669 = vmatprep.subr.bf16.mxu0 0
    %670 = vmatpush1.bf16.msra.mxu0 %v647
    %671 = vmatprep.subr.bf16.mxu0 0
    %672 = vmatpush1.bf16.msra.mxu0 %v648
    %673 = vmatprep.subr.bf16.mxu0 0
    %674 = vmatpush1.bf16.msra.mxu0 0
    %675 = vmatprep.subr.bf16.mxu0 0
    %676 = vmatpush1.bf16.msra.mxu0 0
    %677 = vmatprep.subr.bf16.mxu0 0
    %678 = vmatpush1.bf16.msra.mxu0 0
    %679 = vmatprep.subr.bf16.mxu0 0
    %680 = vmatpush1.bf16.msra.mxu0 0
    %681 = vmatprep.subr.bf16.mxu0 0
    %682 = vmatpush1.bf16.msra.mxu0 0
    %683 = vmatprep.subr.bf16.mxu0 0
    %684 = vmatpush1.bf16.msra.mxu0 0
    %685 = vmatprep.subr.bf16.mxu0 0
    %686 = vmatpush1.bf16.msra.mxu0 0
    %687 = vmatprep.subr.bf16.mxu0 0
    %688 = vmatpush1.bf16.msra.mxu0 0
    %689 = vmatprep.mubr.bf16.mxu0 0
    %690 = vmatmul.mubr.bf16.gmra.mrb[0].mxu0 %v584
    %v691 = vpop.f32.mrb[0].mxu0
    %v692 = vadd.f32 %v607, %v691
    %v693 = vpop.f32.mrb[0].mxu0
    %v694 = vpop.f32.mrb[0].mxu0
    %v695 = vadd.f32 %v607, %v694
    %v696 = vpop.f32.mrb[0].mxu0
    %697 = vmatprep.mubr.bf16.mxu0 0
    %698 = vmatmul.mubr.bf16.gmra.mrb[0].mxu0 %v585
    %v699 = vpop.f32.mrb[0].mxu0
    %v700 = vadd.f32 %v607, %v699
    %v701 = vpop.f32.mrb[0].mxu0
    %v702 = vpop.f32.mrb[0].mxu0
    %v703 = vadd.f32 %v607, %v702
    %v704 = vpop.f32.mrb[0].mxu0
    %705 = vdwg.mxu0
    %v706 = vxor.u32 %v692, 2147483648
    %v707 = vxor.u32 %v695, 2147483648
    %v708 = vxor.u32 %v700, 2147483648
    %v709 = vxor.u32 %v703, 2147483648
    %v710 = vmul.f32 %v706, 1.442695
    %v711 = vpow.pop %v710
    %v712 = vmul.f32 %v707, 1.442695
    %v713 = vpow.pop %v712
    %v714 = vmul.f32 %v708, 1.442695
    %v715 = vpow.pop %v714
    %v716 = vmul.f32 %v709, 1.442695
    %v717 = vpow.pop %v716
    %v718 = vadd.f32 %v711, 1.0
    %v719 = vadd.f32 %v713, 1.0
    %v720 = vadd.f32 %v715, 1.0
    %v721 = vadd.f32 %v717, 1.0
    %v722 = vrcp.pop %v718
    %v723 = vmul.f32 1.0, %v722
    %v724 = vrcp.pop %v719
    %v725 = vmul.f32 1.0, %v724
    %v726 = vrcp.pop %v720
    %v727 = vmul.f32 1.0, %v726
    %v728 = vrcp.pop %v721
    %v729 = vmul.f32 1.0, %v728
    %v730 = vmul.f32 %v692, %v723
    %v731 = vmul.f32 %v695, %v725
    %v732 = vmul.f32 %v700, %v727
    %v733 = vmul.f32 %v703, %v729
    %v734 = vlaneseq
    %v735 = vand.u32 %v734, 127
    %v736 = vmul.u32 %v202, 2
    %v737 = vmul.u32 %v203, 2
    %vm738 = vcmp.eq.s32.totalorder %v735, %v736
    %vm739 = vcmp.eq.s32.totalorder %v735, %v737
    %v740 = vsel %vm738, 1.0, 0.0
    %v741 = vsel %vm739, 1.0, 0.0
    %v742 = vpack.c.bf16 %v741, %v740
    %v743 = vpack.c.bf16 %v731, %v730
    %v744 = vpack.c.bf16 %v733, %v732
    %vm745 = vcmask 261120
    %v747 = vsel %vm745, %v742, 0
    %749 = vmatprep.subr.bf16.mxu0 0
    %750 = vmatpush1.bf16.msra.mxu0 %v743
    %751 = vmatprep.subr.bf16.mxu0 0
    %752 = vmatpush1.bf16.msra.mxu0 %v744
    %753 = vmatprep.subr.bf16.mxu0 0
    %754 = vmatpush1.bf16.msra.mxu0 0
    %755 = vmatprep.subr.bf16.mxu0 0
    %756 = vmatpush1.bf16.msra.mxu0 0
    %757 = vmatprep.subr.bf16.mxu0 0
    %758 = vmatpush1.bf16.msra.mxu0 0
    %759 = vmatprep.subr.bf16.mxu0 0
    %760 = vmatpush1.bf16.msra.mxu0 0
    %761 = vmatprep.subr.bf16.mxu0 0
    %762 = vmatpush1.bf16.msra.mxu0 0
    %763 = vmatprep.subr.bf16.mxu0 0
    %764 = vmatpush1.bf16.msra.mxu0 0
    %765 = vmatprep.subr.bf16.mxu0 0
    %766 = vmatpush1.bf16.msra.mxu0 0
    %767 = vmatprep.subr.bf16.mxu0 0
    %768 = vmatpush1.bf16.msra.mxu0 0
    %769 = vmatprep.subr.bf16.mxu0 0
    %770 = vmatpush1.bf16.msra.mxu0 0
    %771 = vmatprep.subr.bf16.mxu0 0
    %772 = vmatpush1.bf16.msra.mxu0 0
    %773 = vmatprep.subr.bf16.mxu0 0
    %774 = vmatpush1.bf16.msra.mxu0 0
    %775 = vmatprep.subr.bf16.mxu0 0
    %776 = vmatpush1.bf16.msra.mxu0 0
    %777 = vmatprep.subr.bf16.mxu0 0
    %778 = vmatpush1.bf16.msra.mxu0 0
    %779 = vmatprep.subr.bf16.mxu0 0
    %780 = vmatpush1.bf16.msra.mxu0 0
    %781 = vmatprep.mubr.bf16.mxu0 0
    %782 = vmatmul.mubr.bf16.gmra.mrb[0].mxu0 %v747
    %v783 = vpop.f32.mrb[0].mxu0
    %v784 = vadd.f32 0.0, %v783
    %v785 = vpop.f32.mrb[0].mxu0
    %v786 = vpop.f32.mrb[0].mxu0
    %v787 = vadd.f32 0.0, %v786
    %v788 = vpop.f32.mrb[0].mxu0
    %789 = vdwg.mxu0
    %v790 = vrot.slane %v784, 7
    %v791 = vrot.slane %v787, 7
    %v792 = vsel %vm312, %v790, %v791
    %v793 = vsel %vm312, %v791, %v790
    %v794 = vrot.slane %v784, 1
    %v795 = vrot.slane %v787, 1
    %v796 = vsel %vm321, %v794, %v795
    %v797 = vsel %vm321, %v795, %v794
    %v798 = vand.u32 %v202, 7
    %v799 = vand.u32 %v203, 7
    %vm800 = vcmp.eq.s32.totalorder %v798, 0
    %vm801 = vcmp.eq.s32.totalorder %v799, 0
    %v802 = vsel %vm800, 1, 0
    %v803 = vsel %vm801, 1, 0
    %vm804 = vcmp.eq.s32.totalorder %v802, 1
    %vm805 = vcmp.eq.s32.totalorder %v803, 1
    %v806 = vsel %vm804, 0.0, %v793
    %v807 = vsel %vm805, 0.0, %v792
    %vm808 = vcmp.eq.s32.totalorder %v798, 7
    %vm809 = vcmp.eq.s32.totalorder %v799, 7
    %v810 = vsel %vm808, 1, 0
    %v811 = vsel %vm809, 1, 0
    %vm812 = vcmp.eq.s32.totalorder %v810, 1
    %vm813 = vcmp.eq.s32.totalorder %v811, 1
    %v814 = vsel %vm812, 0.0, %v796
    %v815 = vsel %vm813, 0.0, %v797
    %816 = vrot.lane.b32.xlu0 %v784, 32
    %v817 = vpop.permute.xlu0 %816
    %818 = vrot.lane.b32.xlu0 %v787, 32
    %v819 = vpop.permute.xlu0 %818
    %v820 = vadd.f32 %v806, %v817
    %v821 = vadd.f32 %v807, %v819
    %822 = vrot.lane.b32.xlu0 %v814, 64
    %v823 = vpop.permute.xlu0 %822
    %824 = vrot.lane.b32.xlu0 %v815, 64
    %v825 = vpop.permute.xlu0 %824
    %v826 = vadd.f32 %v820, %v823
    %v827 = vadd.f32 %v821, %v825
    %v828 = vpack.c.bf16 %v827, %v826
    %v829 = vld [vmem:[%s10] sm:$0xf]
    %v830 = vld [vmem:[%s10 + $0x4] sm:$0xf]
    %v831 = vld [vmem:[%s10 + $0x8] sm:$0xf]
    %v832 = vld [vmem:[%s10 + $0xc] sm:$0xf]
    %v833 = vld [vmem:[%s10 + $0x10] sm:$0xf]
    %v834 = vld [vmem:[%s10 + $0x14] sm:$0xf]
    %v835 = vld [vmem:[%s10 + $0x18] sm:$0xf]
    %v836 = vld [vmem:[%s10 + $0x1c] sm:$0xf]
    %v837 = vld [vmem:[%s10 + $0x20] sm:$0xf]
    %v838 = vld [vmem:[%s10 + $0x24] sm:$0xf]
    %v839 = vld [vmem:[%s10 + $0x28] sm:$0xf]
    %v840 = vld [vmem:[%s10 + $0x2c] sm:$0xf]
    %v841 = vld [vmem:[%s10 + $0x30] sm:$0xf]
    %v842 = vld [vmem:[%s10 + $0x34] sm:$0xf]
    %v843 = vld [vmem:[%s10 + $0x38] sm:$0xf]
    %v844 = vld [vmem:[%s10 + $0x3c] sm:$0xf]
    %v845 = vld [vmem:[#allocation13] sm:$0x1]
    %v847 = vlaneseq
    %v848 = vshrl.u32 %v847, 7
    %v849 = vsub.s32 0, %v848
    %v850 = vrot.slane %v845, %v849
    %v868 = vunpack.c.l.b16 %v829
    %v869 = vunpack.c.l.b16 %v830
    %v870 = vunpack.c.l.b16 %v831
    %v871 = vunpack.c.l.b16 %v832
    %v872 = vunpack.c.l.b16 %v833
    %v873 = vunpack.c.l.b16 %v834
    %v874 = vunpack.c.l.b16 %v835
    %v875 = vunpack.c.l.b16 %v836
    %v876 = vunpack.c.l.b16 %v837
    %v877 = vunpack.c.l.b16 %v838
    %v878 = vunpack.c.l.b16 %v839
    %v879 = vunpack.c.l.b16 %v840
    %v880 = vunpack.c.l.b16 %v841
    %v881 = vunpack.c.l.b16 %v842
    %v882 = vunpack.c.l.b16 %v843
    %v883 = vunpack.c.l.b16 %v844
    %v884 = vpack.c.b16 %v869, %v868
    %v885 = vpack.c.b16 %v871, %v870
    %v886 = vpack.c.b16 %v873, %v872
    %v887 = vpack.c.b16 %v875, %v874
    %v888 = vpack.c.b16 %v877, %v876
    %v889 = vpack.c.b16 %v879, %v878
    %v890 = vpack.c.b16 %v881, %v880
    %v891 = vpack.c.b16 %v883, %v882
    %900 = vmatprep.subr.bf16.mxu0 0
    %901 = vmatpush1.bf16.msra.mxu0 %v884
    %902 = vmatprep.subr.bf16.mxu0 0
    %903 = vmatpush1.bf16.msra.mxu0 %v885
    %904 = vmatprep.subr.bf16.mxu0 0
    %905 = vmatpush1.bf16.msra.mxu0 %v886
    %906 = vmatprep.subr.bf16.mxu0 0
    %907 = vmatpush1.bf16.msra.mxu0 %v887
    %908 = vmatprep.subr.bf16.mxu0 0
    %909 = vmatpush1.bf16.msra.mxu0 %v888
    %910 = vmatprep.subr.bf16.mxu0 0
    %911 = vmatpush1.bf16.msra.mxu0 %v889
    %912 = vmatprep.subr.bf16.mxu0 0
    %913 = vmatpush1.bf16.msra.mxu0 %v890
    %914 = vmatprep.subr.bf16.mxu0 0
    %915 = vmatpush1.bf16.msra.mxu0 %v891
    %916 = vmatprep.subr.bf16.mxu0 0
    %917 = vmatpush1.bf16.msra.mxu0 0
    %918 = vmatprep.subr.bf16.mxu0 0
    %919 = vmatpush1.bf16.msra.mxu0 0
    %920 = vmatprep.subr.bf16.mxu0 0
    %921 = vmatpush1.bf16.msra.mxu0 0
    %922 = vmatprep.subr.bf16.mxu0 0
    %923 = vmatpush1.bf16.msra.mxu0 0
    %924 = vmatprep.subr.bf16.mxu0 0
    %925 = vmatpush1.bf16.msra.mxu0 0
    %926 = vmatprep.subr.bf16.mxu0 0
    %927 = vmatpush1.bf16.msra.mxu0 0
    %928 = vmatprep.subr.bf16.mxu0 0
    %929 = vmatpush1.bf16.msra.mxu0 0
    %930 = vmatprep.subr.bf16.mxu0 0
    %931 = vmatpush1.bf16.msra.mxu0 0
    %932 = vmatprep.mubr.bf16.mxu0 0
    %933 = vmatmul.mubr.bf16.gmra.mrb[0].mxu0 %v828
    %v934 = vpop.f32.mrb[0].mxu0
    %v935 = vadd.f32 %v850, %v934
    %v936 = vpop.f32.mrb[0].mxu0
    %v937 = vpop.f32.mrb[0].mxu0
    %v938 = vadd.f32 %v850, %v937
    %v939 = vpop.f32.mrb[0].mxu0
    %940 = vdwg.mxu0
    %v941 = vxor.u32 %v935, 2147483648
    %v942 = vxor.u32 %v938, 2147483648
    %v943 = vmul.f32 %v941, 1.442695
    %v944 = vpow.pop %v943
    %v945 = vmul.f32 %v942, 1.442695
    %v946 = vpow.pop %v945
    %v947 = vadd.f32 %v944, 1.0
    %v948 = vadd.f32 %v946, 1.0
    %v949 = vrcp.pop %v947
    %v950 = vmul.f32 1.0, %v949
    %v951 = vrcp.pop %v948
    %v952 = vmul.f32 1.0, %v951
    %v953 = vmul.f32 %v935, %v950
    %v954 = vmul.f32 %v938, %v952
    %v955 = vmul.u32 %v735, 2
    %vm956 = vcmp.eq.s32.totalorder %v202, %v955
    %vm957 = vcmp.eq.s32.totalorder %v203, %v955
    %vm958 = vcmp.eq.s32.totalorder %v204, %v955
    %vm959 = vcmp.eq.s32.totalorder %v205, %v955
    %v960 = vadd.s32 %v955, 1
    %vm961 = vcmp.eq.s32.totalorder %v202, %v960
    %vm962 = vcmp.eq.s32.totalorder %v203, %v960
    %vm963 = vcmp.eq.s32.totalorder %v204, %v960
    %vm964 = vcmp.eq.s32.totalorder %v205, %v960
    %vm965 = vmor %vm956, %vm961
    %vm966 = vmor %vm957, %vm962
    %vm967 = vmor %vm958, %vm963
    %vm968 = vmor %vm959, %vm964
    %v969 = vsel %vm965, 1.0, 0.0
    %v970 = vsel %vm966, 1.0, 0.0
    %v971 = vsel %vm967, 1.0, 0.0
    %v972 = vsel %vm968, 1.0, 0.0
    %v973 = vpack.c.bf16 %v970, %v969
    %v974 = vpack.c.bf16 %v972, %v971
    %v975 = vpack.c.bf16 %v954, %v953
    %vm976 = vcmask 130048
    %v978 = vsel %vm976, %v973, 0
    %v981 = vsel %vm976, %v974, 0
    %983 = vmatprep.subr.bf16.mxu0 0
    %984 = vmatpush1.bf16.msra.mxu0 %v975
    %985 = vmatprep.subr.bf16.mxu0 0
    %986 = vmatpush1.bf16.msra.mxu0 0
    %987 = vmatprep.subr.bf16.mxu0 0
    %988 = vmatpush1.bf16.msra.mxu0 0
    %989 = vmatprep.subr.bf16.mxu0 0
    %990 = vmatpush1.bf16.msra.mxu0 0
    %991 = vmatprep.subr.bf16.mxu0 0
    %992 = vmatpush1.bf16.msra.mxu0 0
    %993 = vmatprep.subr.bf16.mxu0 0
    %994 = vmatpush1.bf16.msra.mxu0 0
    %995 = vmatprep.subr.bf16.mxu0 0
    %996 = vmatpush1.bf16.msra.mxu0 0
    %997 = vmatprep.subr.bf16.mxu0 0
    %998 = vmatpush1.bf16.msra.mxu0 0
    %999 = vmatprep.subr.bf16.mxu0 0
    %1000 = vmatpush1.bf16.msra.mxu0 0
    %1001 = vmatprep.subr.bf16.mxu0 0
    %1002 = vmatpush1.bf16.msra.mxu0 0
    %1003 = vmatprep.subr.bf16.mxu0 0
    %1004 = vmatpush1.bf16.msra.mxu0 0
    %1005 = vmatprep.subr.bf16.mxu0 0
    %1006 = vmatpush1.bf16.msra.mxu0 0
    %1007 = vmatprep.subr.bf16.mxu0 0
    %1008 = vmatpush1.bf16.msra.mxu0 0
    %1009 = vmatprep.subr.bf16.mxu0 0
    %1010 = vmatpush1.bf16.msra.mxu0 0
    %1011 = vmatprep.subr.bf16.mxu0 0
    %1012 = vmatpush1.bf16.msra.mxu0 0
    %1013 = vmatprep.subr.bf16.mxu0 0
    %1014 = vmatpush1.bf16.msra.mxu0 0
    %1015 = vmatprep.mubr.bf16.mxu0 0
    %1016 = vmatmul.mubr.bf16.gmra.mrb[0].mxu0 %v978
    %v1017 = vpop.f32.mrb[0].mxu0
    %v1018 = vadd.f32 0.0, %v1017
    %v1019 = vpop.f32.mrb[0].mxu0
    %v1020 = vpop.f32.mrb[0].mxu0
    %v1021 = vadd.f32 0.0, %v1020
    %v1022 = vpop.f32.mrb[0].mxu0
    %1023 = vmatprep.mubr.bf16.mxu0 0
    %1024 = vmatmul.mubr.bf16.gmra.mrb[0].mxu0 %v981
    %v1025 = vpop.f32.mrb[0].mxu0
    %v1026 = vadd.f32 0.0, %v1025
    %v1027 = vpop.f32.mrb[0].mxu0
    %v1028 = vpop.f32.mrb[0].mxu0
    %v1029 = vadd.f32 0.0, %v1028
    %v1030 = vpop.f32.mrb[0].mxu0
    %1031 = vdwg.mxu0
    %v1032 = vrot.slane %v1018, 7
    %v1033 = vrot.slane %v1021, 7
    %v1034 = vrot.slane %v1026, 7
    %v1035 = vrot.slane %v1029, 7
    %v1036 = vsel %vm312, %v1034, %v1035
    %v1037 = vsel %vm312, %v1033, %v1034
    %v1038 = vsel %vm312, %v1032, %v1033
    %v1039 = vsel %vm312, %v1035, %v1032
    %v1040 = vrot.slane %v1018, 1
    %v1041 = vrot.slane %v1021, 1
    %v1042 = vrot.slane %v1026, 1
    %v1043 = vrot.slane %v1029, 1
    %v1044 = vsel %vm321, %v1042, %v1043
    %v1045 = vsel %vm321, %v1041, %v1042
    %v1046 = vsel %vm321, %v1040, %v1041
    %v1047 = vsel %vm321, %v1043, %v1040
    %v1048 = vsel %vm338, 0.0, %v1039
    %v1049 = vsel %vm339, 0.0, %v1038
    %v1050 = vsel %vm340, 0.0, %v1037
    %v1051 = vsel %vm341, 0.0, %v1036
    %v1052 = vsel %vm354, 0.0, %v1046
    %v1053 = vsel %vm355, 0.0, %v1045
    %v1054 = vsel %vm356, 0.0, %v1044
    %v1055 = vsel %vm357, 0.0, %v1047
    %1056 = vrot.lane.b32.xlu0 %v1018, 32
    %v1057 = vpop.permute.xlu0 %1056
    %1058 = vrot.lane.b32.xlu0 %v1021, 32
    %v1059 = vpop.permute.xlu0 %1058
    %1060 = vrot.lane.b32.xlu0 %v1026, 32
    %v1061 = vpop.permute.xlu0 %1060
    %1062 = vrot.lane.b32.xlu0 %v1029, 32
    %v1063 = vpop.permute.xlu0 %1062
    %v1064 = vadd.f32 %v1048, %v1057
    %v1065 = vadd.f32 %v1049, %v1059
    %v1066 = vadd.f32 %v1050, %v1061
    %v1067 = vadd.f32 %v1051, %v1063
    %1068 = vrot.lane.b32.xlu0 %v1052, 64
    %v1069 = vpop.permute.xlu0 %1068
    %1070 = vrot.lane.b32.xlu0 %v1053, 64
    %v1071 = vpop.permute.xlu0 %1070
    %1072 = vrot.lane.b32.xlu0 %v1054, 64
    %v1073 = vpop.permute.xlu0 %1072
    %1074 = vrot.lane.b32.xlu0 %v1055, 64
    %v1075 = vpop.permute.xlu0 %1074
    %v1076 = vadd.f32 %v1064, %v1069
    %v1077 = vadd.f32 %v1065, %v1071
    %v1078 = vadd.f32 %v1066, %v1073
    %v1079 = vadd.f32 %v1067, %v1075
    %v1080 = vpack.c.bf16 %v1077, %v1076
    %v1081 = vpack.c.bf16 %v1079, %v1078
    %v1082 = vld [vmem:[%s12] sm:$0xf]
    %v1083 = vld [vmem:[%s12 + $0x4] sm:$0xf]
    %v1084 = vld [vmem:[%s12 + $0x8] sm:$0xf]
    %v1085 = vld [vmem:[%s12 + $0xc] sm:$0xf]
    %v1086 = vld [vmem:[%s12 + $0x10] sm:$0xf]
    %v1087 = vld [vmem:[%s12 + $0x14] sm:$0xf]
    %v1088 = vld [vmem:[%s12 + $0x18] sm:$0xf]
    %v1089 = vld [vmem:[%s12 + $0x1c] sm:$0xf]
    %v1090 = vld [vmem:[%s12 + $0x20] sm:$0xf]
    %v1091 = vld [vmem:[%s12 + $0x24] sm:$0xf]
    %v1092 = vld [vmem:[%s12 + $0x28] sm:$0xf]
    %v1093 = vld [vmem:[%s12 + $0x2c] sm:$0xf]
    %v1094 = vld [vmem:[%s12 + $0x30] sm:$0xf]
    %v1095 = vld [vmem:[%s12 + $0x34] sm:$0xf]
    %v1096 = vld [vmem:[%s12 + $0x38] sm:$0xf]
    %v1097 = vld [vmem:[%s12 + $0x3c] sm:$0xf]
    %v1098 = vld [vmem:[#allocation15] sm:$0xf]
    %v1099 = vld [vmem:[#allocation15 + $0x4] sm:$0xf]
    %v1100 = vld [vmem:[#allocation15 + $0x8] sm:$0xf]
    %v1101 = vld [vmem:[#allocation15 + $0xc] sm:$0xf]
    %v1102 = vld [vmem:[#allocation15 + $0x10] sm:$0xf]
    %v1103 = vld [vmem:[#allocation15 + $0x14] sm:$0xf]
    %v1104 = vld [vmem:[#allocation15 + $0x18] sm:$0xf]
    %v1105 = vld [vmem:[#allocation15 + $0x1c] sm:$0xf]
    %v1106 = vld [vmem:[#allocation15 + $0x20] sm:$0xf]
    %v1107 = vld [vmem:[#allocation15 + $0x24] sm:$0xf]
    %v1108 = vld [vmem:[#allocation15 + $0x28] sm:$0xf]
    %v1109 = vld [vmem:[#allocation15 + $0x2c] sm:$0xf]
    %v1110 = vld [vmem:[#allocation15 + $0x30] sm:$0xf]
    %v1111 = vld [vmem:[#allocation15 + $0x34] sm:$0xf]
    %v1112 = vld [vmem:[#allocation15 + $0x38] sm:$0xf]
    %v1113 = vld [vmem:[#allocation15 + $0x3c] sm:$0xf]
    %v1130 = vunpack.c.l.b16 %v1098
    %v1131 = vunpack.c.l.b16 %v1099
    %v1132 = vunpack.c.l.b16 %v1100
    %v1133 = vunpack.c.l.b16 %v1101
    %v1134 = vunpack.c.l.b16 %v1102
    %v1135 = vunpack.c.l.b16 %v1103
    %v1136 = vunpack.c.l.b16 %v1104
    %v1137 = vunpack.c.l.b16 %v1105
    %v1138 = vunpack.c.l.b16 %v1106
    %v1139 = vunpack.c.l.b16 %v1107
    %v1140 = vunpack.c.l.b16 %v1108
    %v1141 = vunpack.c.l.b16 %v1109
    %v1142 = vunpack.c.l.b16 %v1110
    %v1143 = vunpack.c.l.b16 %v1111
    %v1144 = vunpack.c.l.b16 %v1112
    %v1145 = vunpack.c.l.b16 %v1113
    %v1146 = vpack.c.b16 %v1131, %v1130
    %v1147 = vpack.c.b16 %v1133, %v1132
    %v1148 = vpack.c.b16 %v1135, %v1134
    %v1149 = vpack.c.b16 %v1137, %v1136
    %v1150 = vpack.c.b16 %v1139, %v1138
    %v1151 = vpack.c.b16 %v1141, %v1140
    %v1152 = vpack.c.b16 %v1143, %v1142
    %v1153 = vpack.c.b16 %v1145, %v1144
    %1162 = vmatprep.subr.bf16.mxu0 0
    %1163 = vmatpush1.bf16.msra.mxu0 %v1146
    %1164 = vmatprep.subr.bf16.mxu0 0
    %1165 = vmatpush1.bf16.msra.mxu0 %v1147
    %1166 = vmatprep.subr.bf16.mxu0 0
    %1167 = vmatpush1.bf16.msra.mxu0 %v1148
    %1168 = vmatprep.subr.bf16.mxu0 0
    %1169 = vmatpush1.bf16.msra.mxu0 %v1149
    %1170 = vmatprep.subr.bf16.mxu0 0
    %1171 = vmatpush1.bf16.msra.mxu0 %v1150
    %1172 = vmatprep.subr.bf16.mxu0 0
    %1173 = vmatpush1.bf16.msra.mxu0 %v1151
    %1174 = vmatprep.subr.bf16.mxu0 0
    %1175 = vmatpush1.bf16.msra.mxu0 %v1152
    %1176 = vmatprep.subr.bf16.mxu0 0
    %1177 = vmatpush1.bf16.msra.mxu0 %v1153
    %1178 = vmatprep.subr.bf16.mxu0 0
    %1179 = vmatpush1.bf16.msra.mxu0 0
    %1180 = vmatprep.subr.bf16.mxu0 0
    %1181 = vmatpush1.bf16.msra.mxu0 0
    %1182 = vmatprep.subr.bf16.mxu0 0
    %1183 = vmatpush1.bf16.msra.mxu0 0
    %1184 = vmatprep.subr.bf16.mxu0 0
    %1185 = vmatpush1.bf16.msra.mxu0 0
    %1186 = vmatprep.subr.bf16.mxu0 0
    %1187 = vmatpush1.bf16.msra.mxu0 0
    %1188 = vmatprep.subr.bf16.mxu0 0
    %1189 = vmatpush1.bf16.msra.mxu0 0
    %1190 = vmatprep.subr.bf16.mxu0 0
    %1191 = vmatpush1.bf16.msra.mxu0 0
    %1192 = vmatprep.subr.bf16.mxu0 0
    %1193 = vmatpush1.bf16.msra.mxu0 0
    %1194 = vmatprep.mubr.bf16.mxu0 0
    %1195 = vmatmul.mubr.bf16.gmra.mrb[0].mxu0 %v584
    %v1196 = vpop.f32.mrb[0].mxu0
    %v1197 = vadd.f32 0.0, %v1196
    %v1198 = vpop.f32.mrb[0].mxu0
    %v1199 = vpop.f32.mrb[0].mxu0
    %v1200 = vadd.f32 0.0, %v1199
    %v1201 = vpop.f32.mrb[0].mxu0
    %1202 = vmatprep.mubr.bf16.mxu0 0
    %1203 = vmatmul.mubr.bf16.gmra.mrb[0].mxu0 %v585
    %v1204 = vpop.f32.mrb[0].mxu0
    %v1205 = vadd.f32 0.0, %v1204
    %v1206 = vpop.f32.mrb[0].mxu0
    %v1207 = vpop.f32.mrb[0].mxu0
    %v1208 = vadd.f32 0.0, %v1207
    %v1209 = vpop.f32.mrb[0].mxu0
    %1210 = vdwg.mxu0
    %v1227 = vunpack.c.l.b16 %v1082
    %v1228 = vunpack.c.l.b16 %v1083
    %v1229 = vunpack.c.l.b16 %v1084
    %v1230 = vunpack.c.l.b16 %v1085
    %v1231 = vunpack.c.l.b16 %v1086
    %v1232 = vunpack.c.l.b16 %v1087
    %v1233 = vunpack.c.l.b16 %v1088
    %v1234 = vunpack.c.l.b16 %v1089
    %v1235 = vunpack.c.l.b16 %v1090
    %v1236 = vunpack.c.l.b16 %v1091
    %v1237 = vunpack.c.l.b16 %v1092
    %v1238 = vunpack.c.l.b16 %v1093
    %v1239 = vunpack.c.l.b16 %v1094
    %v1240 = vunpack.c.l.b16 %v1095
    %v1241 = vunpack.c.l.b16 %v1096
    %v1242 = vunpack.c.l.b16 %v1097
    %v1243 = vpack.c.b16 %v1228, %v1227
    %v1244 = vpack.c.b16 %v1230, %v1229
    %v1245 = vpack.c.b16 %v1232, %v1231
    %v1246 = vpack.c.b16 %v1234, %v1233
    %v1247 = vpack.c.b16 %v1236, %v1235
    %v1248 = vpack.c.b16 %v1238, %v1237
    %v1249 = vpack.c.b16 %v1240, %v1239
    %v1250 = vpack.c.b16 %v1242, %v1241
    %1259 = vmatprep.subr.bf16.mxu0 0
    %1260 = vmatpush1.bf16.msra.mxu0 %v1243
    %1261 = vmatprep.subr.bf16.mxu0 0
    %1262 = vmatpush1.bf16.msra.mxu0 %v1244
    %1263 = vmatprep.subr.bf16.mxu0 0
    %1264 = vmatpush1.bf16.msra.mxu0 %v1245
    %1265 = vmatprep.subr.bf16.mxu0 0
    %1266 = vmatpush1.bf16.msra.mxu0 %v1246
    %1267 = vmatprep.subr.bf16.mxu0 0
    %1268 = vmatpush1.bf16.msra.mxu0 %v1247
    %1269 = vmatprep.subr.bf16.mxu0 0
    %1270 = vmatpush1.bf16.msra.mxu0 %v1248
    %1271 = vmatprep.subr.bf16.mxu0 0
    %1272 = vmatpush1.bf16.msra.mxu0 %v1249
    %1273 = vmatprep.subr.bf16.mxu0 0
    %1274 = vmatpush1.bf16.msra.mxu0 %v1250
    %1275 = vmatprep.subr.bf16.mxu0 0
    %1276 = vmatpush1.bf16.msra.mxu0 0
    %1277 = vmatprep.subr.bf16.mxu0 0
    %1278 = vmatpush1.bf16.msra.mxu0 0
    %1279 = vmatprep.subr.bf16.mxu0 0
    %1280 = vmatpush1.bf16.msra.mxu0 0
    %1281 = vmatprep.subr.bf16.mxu0 0
    %1282 = vmatpush1.bf16.msra.mxu0 0
    %1283 = vmatprep.subr.bf16.mxu0 0
    %1284 = vmatpush1.bf16.msra.mxu0 0
    %1285 = vmatprep.subr.bf16.mxu0 0
    %1286 = vmatpush1.bf16.msra.mxu0 0
    %1287 = vmatprep.subr.bf16.mxu0 0
    %1288 = vmatpush1.bf16.msra.mxu0 0
    %1289 = vmatprep.subr.bf16.mxu0 0
    %1290 = vmatpush1.bf16.msra.mxu0 0
    %1291 = vmatprep.mubr.bf16.mxu0 0
    %1292 = vmatmul.mubr.bf16.gmra.mrb[0].mxu0 %v1080
    %v1293 = vpop.f32.mrb[0].mxu0
    %v1294 = vadd.f32 %v1197, %v1293
    %v1295 = vpop.f32.mrb[0].mxu0
    %v1296 = vpop.f32.mrb[0].mxu0
    %v1297 = vadd.f32 %v1200, %v1296
    %v1298 = vpop.f32.mrb[0].mxu0
    %1299 = vmatprep.mubr.bf16.mxu0 0
    %1300 = vmatmul.mubr.bf16.gmra.mrb[0].mxu0 %v1081
    %v1301 = vpop.f32.mrb[0].mxu0
    %v1302 = vadd.f32 %v1205, %v1301
    %v1303 = vpop.f32.mrb[0].mxu0
    %v1304 = vpop.f32.mrb[0].mxu0
    %v1305 = vadd.f32 %v1208, %v1304
    %v1306 = vpop.f32.mrb[0].mxu0
    %1307 = vdwg.mxu0
    %v1308 = vld [vmem:[#allocation16] sm:$0x1]
    %v1310 = vlaneseq
    %v1311 = vshrl.u32 %v1310, 7
    %v1312 = vsub.s32 0, %v1311
    %v1313 = vrot.slane %v1308, %v1312
    %v1315 = vadd.f32 %v1294, %v1313
    %v1316 = vadd.f32 %v1297, %v1313
    %v1317 = vadd.f32 %v1302, %v1313
    %v1318 = vadd.f32 %v1305, %v1313
    %v1319 = vxor.u32 %v1315, 2147483648
    %v1320 = vxor.u32 %v1316, 2147483648
    %v1321 = vxor.u32 %v1317, 2147483648
    %v1322 = vxor.u32 %v1318, 2147483648
    %v1323 = vmul.f32 %v1319, 1.442695
    %v1324 = vpow.pop %v1323
    %v1325 = vmul.f32 %v1320, 1.442695
    %v1326 = vpow.pop %v1325
    %v1327 = vmul.f32 %v1321, 1.442695
    %v1328 = vpow.pop %v1327
    %v1329 = vmul.f32 %v1322, 1.442695
    %v1330 = vpow.pop %v1329
    %v1331 = vadd.f32 %v1324, 1.0
    %v1332 = vadd.f32 %v1326, 1.0
    %v1333 = vadd.f32 %v1328, 1.0
    %v1334 = vadd.f32 %v1330, 1.0
    %v1335 = vrcp.pop %v1331
    %v1336 = vmul.f32 1.0, %v1335
    %v1337 = vrcp.pop %v1332
    %v1338 = vmul.f32 1.0, %v1337
    %v1339 = vrcp.pop %v1333
    %v1340 = vmul.f32 1.0, %v1339
    %v1341 = vrcp.pop %v1334
    %v1342 = vmul.f32 1.0, %v1341
    %v1343 = vmul.f32 %v1315, %v1336
    %v1344 = vmul.f32 %v1316, %v1338
    %v1345 = vmul.f32 %v1317, %v1340
    %v1346 = vmul.f32 %v1318, %v1342
    %v1347 = vrot.slane %v1343, 7
    %v1348 = vrot.slane %v1344, 7
    %v1349 = vrot.slane %v1345, 7
    %v1350 = vrot.slane %v1346, 7
    %v1351 = vsel %vm312, %v1349, %v1350
    %v1352 = vsel %vm312, %v1348, %v1349
    %v1353 = vsel %vm312, %v1347, %v1348
    %v1354 = vsel %vm312, %v1350, %v1347
    %v1355 = vrot.slane %v1343, 1
    %v1356 = vrot.slane %v1344, 1
    %v1357 = vrot.slane %v1345, 1
    %v1358 = vrot.slane %v1346, 1
    %v1359 = vsel %vm321, %v1357, %v1358
    %v1360 = vsel %vm321, %v1356, %v1357
    %v1361 = vsel %vm321, %v1355, %v1356
    %v1362 = vsel %vm321, %v1358, %v1355
    %v1363 = vsel %vm338, 0.0, %v1354
    %v1364 = vsel %vm339, 0.0, %v1353
    %v1365 = vsel %vm340, 0.0, %v1352
    %v1366 = vsel %vm341, 0.0, %v1351
    %v1367 = vsel %vm354, 0.0, %v1361
    %v1368 = vsel %vm355, 0.0, %v1360
    %v1369 = vsel %vm356, 0.0, %v1359
    %v1370 = vsel %vm357, 0.0, %v1362
    %1371 = vrot.lane.b32.xlu0 %v1343, 32
    %v1372 = vpop.permute.xlu0 %1371
    %1373 = vrot.lane.b32.xlu0 %v1344, 32
    %v1374 = vpop.permute.xlu0 %1373
    %1375 = vrot.lane.b32.xlu0 %v1345, 32
    %v1376 = vpop.permute.xlu0 %1375
    %1377 = vrot.lane.b32.xlu0 %v1346, 32
    %v1378 = vpop.permute.xlu0 %1377
    %v1379 = vadd.f32 %v1363, %v1372
    %v1380 = vadd.f32 %v1364, %v1374
    %v1381 = vadd.f32 %v1365, %v1376
    %v1382 = vadd.f32 %v1366, %v1378
    %1383 = vrot.lane.b32.xlu0 %v1367, 64
    %v1384 = vpop.permute.xlu0 %1383
    %1385 = vrot.lane.b32.xlu0 %v1368, 64
    %v1386 = vpop.permute.xlu0 %1385
    %1387 = vrot.lane.b32.xlu0 %v1369, 64
    %v1388 = vpop.permute.xlu0 %1387
    %1389 = vrot.lane.b32.xlu0 %v1370, 64
    %v1390 = vpop.permute.xlu0 %1389
    %v1391 = vadd.f32 %v1379, %v1384
    %v1392 = vadd.f32 %v1380, %v1386
    %v1393 = vadd.f32 %v1381, %v1388
    %v1394 = vadd.f32 %v1382, %v1390
    %v1395 = vpack.c.bf16 %v1392, %v1391
    %v1396 = vpack.c.bf16 %v1394, %v1393
    %v1397 = vld [vmem:[#allocation18] sm:$0xf]
    %v1398 = vld [vmem:[#allocation18 + $0x4] sm:$0xf]
    %v1399 = vld [vmem:[#allocation18 + $0x8] sm:$0xf]
    %v1400 = vld [vmem:[#allocation18 + $0xc] sm:$0xf]
    %v1401 = vld [vmem:[#allocation18 + $0x10] sm:$0xf]
    %v1402 = vld [vmem:[#allocation18 + $0x14] sm:$0xf]
    %v1403 = vld [vmem:[#allocation18 + $0x18] sm:$0xf]
    %v1404 = vld [vmem:[#allocation18 + $0x1c] sm:$0xf]
    %v1405 = vld [vmem:[#allocation18 + $0x20] sm:$0xf]
    %v1406 = vld [vmem:[#allocation18 + $0x24] sm:$0xf]
    %v1407 = vld [vmem:[#allocation18 + $0x28] sm:$0xf]
    %v1408 = vld [vmem:[#allocation18 + $0x2c] sm:$0xf]
    %v1409 = vld [vmem:[#allocation18 + $0x30] sm:$0xf]
    %v1410 = vld [vmem:[#allocation18 + $0x34] sm:$0xf]
    %v1411 = vld [vmem:[#allocation18 + $0x38] sm:$0xf]
    %v1412 = vld [vmem:[#allocation18 + $0x3c] sm:$0xf]
    %v1413 = vld [vmem:[#allocation19] sm:$0x1]
    %v1415 = vlaneseq
    %v1416 = vshrl.u32 %v1415, 7
    %v1417 = vsub.s32 0, %v1416
    %v1418 = vrot.slane %v1413, %v1417
    %v1436 = vunpack.c.l.b16 %v1397
    %v1437 = vunpack.c.l.b16 %v1398
    %v1438 = vunpack.c.l.b16 %v1399
    %v1439 = vunpack.c.l.b16 %v1400
    %v1440 = vunpack.c.l.b16 %v1401
    %v1441 = vunpack.c.l.b16 %v1402
    %v1442 = vunpack.c.l.b16 %v1403
    %v1443 = vunpack.c.l.b16 %v1404
    %v1444 = vunpack.c.l.b16 %v1405
    %v1445 = vunpack.c.l.b16 %v1406
    %v1446 = vunpack.c.l.b16 %v1407
    %v1447 = vunpack.c.l.b16 %v1408
    %v1448 = vunpack.c.l.b16 %v1409
    %v1449 = vunpack.c.l.b16 %v1410
    %v1450 = vunpack.c.l.b16 %v1411
    %v1451 = vunpack.c.l.b16 %v1412
    %v1452 = vpack.c.b16 %v1437, %v1436
    %v1453 = vpack.c.b16 %v1439, %v1438
    %v1454 = vpack.c.b16 %v1441, %v1440
    %v1455 = vpack.c.b16 %v1443, %v1442
    %v1456 = vpack.c.b16 %v1445, %v1444
    %v1457 = vpack.c.b16 %v1447, %v1446
    %v1458 = vpack.c.b16 %v1449, %v1448
    %v1459 = vpack.c.b16 %v1451, %v1450
    %1468 = vmatprep.subr.bf16.mxu0 0
    %1469 = vmatpush1.bf16.msra.mxu0 %v1452
    %1470 = vmatprep.subr.bf16.mxu0 0
    %1471 = vmatpush1.bf16.msra.mxu0 %v1453
    %1472 = vmatprep.subr.bf16.mxu0 0
    %1473 = vmatpush1.bf16.msra.mxu0 %v1454
    %1474 = vmatprep.subr.bf16.mxu0 0
    %1475 = vmatpush1.bf16.msra.mxu0 %v1455
    %1476 = vmatprep.subr.bf16.mxu0 0
    %1477 = vmatpush1.bf16.msra.mxu0 %v1456
    %1478 = vmatprep.subr.bf16.mxu0 0
    %1479 = vmatpush1.bf16.msra.mxu0 %v1457
    %1480 = vmatprep.subr.bf16.mxu0 0
    %1481 = vmatpush1.bf16.msra.mxu0 %v1458
    %1482 = vmatprep.subr.bf16.mxu0 0
    %1483 = vmatpush1.bf16.msra.mxu0 %v1459
    %1484 = vmatprep.subr.bf16.mxu0 0
    %1485 = vmatpush1.bf16.msra.mxu0 0
    %1486 = vmatprep.subr.bf16.mxu0 0
    %1487 = vmatpush1.bf16.msra.mxu0 0
    %1488 = vmatprep.subr.bf16.mxu0 0
    %1489 = vmatpush1.bf16.msra.mxu0 0
    %1490 = vmatprep.subr.bf16.mxu0 0
    %1491 = vmatpush1.bf16.msra.mxu0 0
    %1492 = vmatprep.subr.bf16.mxu0 0
    %1493 = vmatpush1.bf16.msra.mxu0 0
    %1494 = vmatprep.subr.bf16.mxu0 0
    %1495 = vmatpush1.bf16.msra.mxu0 0
    %1496 = vmatprep.subr.bf16.mxu0 0
    %1497 = vmatpush1.bf16.msra.mxu0 0
    %1498 = vmatprep.subr.bf16.mxu0 0
    %1499 = vmatpush1.bf16.msra.mxu0 0
    %1500 = vmatprep.mubr.bf16.mxu0 0
    %1501 = vmatmul.mubr.bf16.gmra.mrb[0].mxu0 %v1395
    %v1502 = vpop.f32.mrb[0].mxu0
    %v1503 = vadd.f32 %v1418, %v1502
    %v1504 = vpop.f32.mrb[0].mxu0
    %v1505 = vpop.f32.mrb[0].mxu0
    %v1506 = vadd.f32 %v1418, %v1505
    %v1507 = vpop.f32.mrb[0].mxu0
    %1508 = vmatprep.mubr.bf16.mxu0 0
    %1509 = vmatmul.mubr.bf16.gmra.mrb[0].mxu0 %v1396
    %v1510 = vpop.f32.mrb[0].mxu0
    %v1511 = vadd.f32 %v1418, %v1510
    %v1512 = vpop.f32.mrb[0].mxu0
    %v1513 = vpop.f32.mrb[0].mxu0
    %v1514 = vadd.f32 %v1418, %v1513
    %v1515 = vpop.f32.mrb[0].mxu0
    %1516 = vdwg.mxu0
    %v1517 = vsub.f32 %v1503, %v197
    %v1518 = vsub.f32 %v1506, %v198
    %v1519 = vsub.f32 %v1511, %v199
    %v1520 = vsub.f32 %v1514, %v200
    %v1521 = vmul.f32 %v1517, %v1517
    %v1522 = vmul.f32 %v1518, %v1518
    %v1523 = vmul.f32 %v1519, %v1519
    %v1524 = vmul.f32 %v1520, %v1520
    %v1525 = vadd.f32 %v1521, %v1522
    %v1526 = vadd.f32 %v1525, %v1523
    %v1527 = vadd.f32 %v1526, %v1524
    %1528 = vadd.xlane.f32.xlu0 %v1527
    %v1529 = vpop.xlane.xlu0 %1528
    %v1530 = vrot.slane %v1529, 4
    %v1531 = vadd.f32 %v1529, %v1530
    %v1532 = vrot.slane %v1531, 2
    %v1533 = vadd.f32 %v1531, %v1532
    %v1534 = vrot.slane %v1533, 1
    %v1535 = vadd.f32 %v1533, %v1534
    %s1536 = vtos %v1535
    %s1537 = smul.f32 %s1536, 0.0078125
    %s1538 = scalar_lea.smem [#allocation21], 0
    %1539 = sst [smem:[%s1538]] %s1537
    // Predicated region
    $region114: #{ldm_unet_loss.1} parent=1 // pred_check
      _
    $region115: #{ldm_unet_loss.1} parent=1 // pred_check_branch
      %1541 = sbr.rel (0) target = $region117
    $region116: #{ldm_unet_loss.1} parent=1 // pred_region
      %s1543 = ssub.s32 16, 16
      %1544 = vsyncadd [#allocation4], %s1543
      %1547 = dma.smem_to_hbm [#allocation21], 16, %s17, [#allocation4]
    $region117: #{ldm_unet_loss.1} parent=1 // pred_fallthru
      _
    // Predicated region
    $region118: #{ldm_unet_loss.1} parent=1 // pred_check
      _
    $region119: #{ldm_unet_loss.1} parent=1 // pred_check_branch
      %1549 = sbr.rel (0) target = $region121
    $region120: #{ldm_unet_loss.1} parent=1 // pred_region
      %1550 = dma.done [#allocation4], 16
    $region121: #{ldm_unet_loss.1} parent=1 // pred_fallthru
      _
    %1551 = sfence
    %1552 = vsyncpa [#allocation3], 1
    %1553 = vsyncpa [#allocation11], 1
    %1554 = vsyncpa [#allocation14], 1
    %1555 = vsyncpa [#allocation17], 1
    %1556 = vsyncpa [#allocation20], 1
    %1557 = vsyncpa [#allocation4], 1
    %1558 = vsyncpa [#allocation5], 1
    %1559 = vsyncpa [#allocation7], 1

</llo_original>
